<compile_context>
chip_gen: v5e
topology: v5e:2x2
jax: 0.10.0
libtpu: 0.0.40
codegen_flags: <defaults>
</compile_context>

<pallas_src>
import math
import jax
import jax.numpy as jnp
from jax import lax
from jax.experimental import pallas as pl
from jax.experimental.pallas import tpu as pltpu

SQRT_HALF = math.sqrt(0.5)
NEG_INF = -1e30   # finite additive mask value (avoids NaN when a row is fully masked)


# --------------------------------------------------------------------------
# Shared in-kernel math: causal conv (im2col) -> GLU -> attention
# --------------------------------------------------------------------------

def _conv_glu_attn(x2d, emb2d, encc, encz, addmask,
                   wca, wcb, bca, bcb, w_in, b_in, w_out, b_out,
                   *, pad_value, B, T, K, compute_dtype):
    """One decoder layer (minus residual add) for all batch elements at once.

    x2d: (B*T, Cin) f32   emb2d: (B*T, E) f32   encc/encz: (B, S, E) compute_dtype
    addmask: (B, 1, S) f32 additive mask        wca/wcb: (K*Cin, Cout) im2col GLU halves
    returns x_attn: (B*T, Cout) f32
    """
    N, Cin = x2d.shape
    E = emb2d.shape[-1]

    # --- causal Conv1d as one im2col matmul per GLU half ---------------------
    x3 = x2d.reshape(B, T, Cin)
    pad_rows = jnp.full((B, K - 1, Cin), pad_value, x3.dtype)     # built in VMEM, not HBM
    xpad = jnp.concatenate([pad_rows, x3], axis=1)                # (B, T+K-1, Cin)
    xcol = jnp.concatenate([xpad[:, j:j + T, :] for j in range(K)], axis=-1)  # (B, T, K*Cin)
    xcol = xcol.reshape(N, K * Cin).astype(compute_dtype)

    a = jnp.dot(xcol, wca, preferred_element_type=jnp.float32) + bca   # (N, Cout)
    g = jnp.dot(xcol, wcb, preferred_element_type=jnp.float32) + bcb   # (N, Cout)
    conved = a * jax.nn.sigmoid(g)                                     # GLU (f32)

    # --- attention ------------------------------------------------------------
    conved_emb = jnp.dot(conved.astype(compute_dtype), w_in,
                         preferred_element_type=jnp.float32) + b_in    # (N, E)
    combined = ((conved_emb + emb2d) * SQRT_HALF).reshape(B, T, E)

    # energy[b,t,s] = combined[b,t,:] . encc[b,s,:]   (no explicit transpose)
    energy = lax.dot_general(combined.astype(compute_dtype), encc,
                             (((2,), (2,)), ((0,), (0,))),
                             preferred_element_type=jnp.float32)       # (B, T, S)
    energy = energy + addmask
    m = jnp.max(energy, axis=-1, keepdims=True)
    p = jnp.exp(energy - m)
    denom = jnp.sum(p, axis=-1, keepdims=True)
    attn = p * pl.reciprocal(denom, approx=True)                       # softmax over S

    attended = lax.dot_general(attn.astype(compute_dtype), encz,
                               (((2,), (1,)), ((0,), (0,))),
                               preferred_element_type=jnp.float32)     # (B, T, E)
    attended = jnp.dot(attended.reshape(N, E).astype(compute_dtype), w_out,
                       preferred_element_type=jnp.float32) + b_out     # (N, Cout)
    return (conved + attended) * SQRT_HALF


# --------------------------------------------------------------------------
# Fused decoder stack: embed2inchannels + all layers in a single pallas_call
# --------------------------------------------------------------------------

def decoder_stack(embedded, encc, encz, addmask, params, padding_idx, compute_dtype):
    """grid=(L,) 'arbitrary'; x carried in VMEM scratch; per-layer weights stacked on L."""
    layers = params["layers"]
    L = len(layers)
    B, T, E = embedded.shape
    S = encc.shape[1]
    N = B * T
    K = layers[0]["kernel_size"]
    C = layers[0]["w_conv"].shape[2] // 2
    use_residual = layers[0]["residual"] > 0
    pad_value = float(padding_idx)

    w_e2c, b_e2c = params["embed2inchannels"]
    emb2d = embedded.reshape(N, E)

    # stacked per-layer weights; GLU halves pre-split; conv in (K*Cin, Cout) im2col form
    wca = jnp.stack([l["w_conv"][:, :, :C].reshape(K * C, C) for l in layers]).astype(compute_dtype)
    wcb = jnp.stack([l["w_conv"][:, :, C:].reshape(K * C, C) for l in layers]).astype(compute_dtype)
    bca = jnp.stack([l["b_conv"][:C].reshape(1, C) for l in layers])
    bcb = jnp.stack([l["b_conv"][C:].reshape(1, C) for l in layers])
    w_in = jnp.stack([l["attn_w_in"] for l in layers]).astype(compute_dtype)
    b_in = jnp.stack([l["attn_b_in"].reshape(1, E) for l in layers])
    w_out = jnp.stack([l["attn_w_out"] for l in layers]).astype(compute_dtype)
    b_out = jnp.stack([l["attn_b_out"].reshape(1, C) for l in layers])

    def kernel(emb_ref, encc_ref, encz_ref, mask_ref, we2c_ref, be2c_ref,
               wca_ref, wcb_ref, bca_ref, bcb_ref, win_ref, bin_ref, wout_ref, bout_ref,
               o_ref, x_sc):
        l = pl.program_id(0)

        @pl.when(l == 0)
        def _():
            # fused embed2inchannels; x stays resident in VMEM for the whole stack
            x_sc[...] = jnp.dot(emb_ref[...].astype(compute_dtype), we2c_ref[...],
                                preferred_element_type=jnp.float32) + be2c_ref[...]

        x = x_sc[...]                                                   # (N, C)
        x_attn = _conv_glu_attn(
            x, emb_ref[...], encc_ref[...], encz_ref[...], mask_ref[...],
            wca_ref[0], wcb_ref[0], bca_ref[0], bcb_ref[0],
            win_ref[0], bin_ref[0], wout_ref[0], bout_ref[0],
            pad_value=pad_value, B=B, T=T, K=K, compute_dtype=compute_dtype)
        x_new = (x_attn + x) * SQRT_HALF if use_residual else x_attn
        x_sc[...] = x_new

        @pl.when(l == L - 1)
        def _():
            o_ref[...] = x_new

    full2 = lambda l: (0, 0)
    full3 = lambda l: (0, 0, 0)
    perl = lambda l: (l, 0, 0)

    flops = L * (4 * N * K * C * C + 4 * N * C * E + 4 * N * S * E) + 2 * N * E * C
    transcendentals = L * N * (C + S + 1)
    bytes_accessed = (emb2d.size + N * C) * 4 + 2 * (encc.size + encz.size) \
        + 2 * (wca.size + wcb.size + w_in.size + w_out.size + w_e2c.size) \
        + 4 * (bca.size + bcb.size + b_in.size + b_out.size + b_e2c.size + addmask.size)

    return pl.pallas_call(
        kernel,
        grid=(L,),
        in_specs=[
            pl.BlockSpec((N, E), full2),            # embedded (flattened to B*T rows)
            pl.BlockSpec((B, S, E), full3),         # encoder conved
            pl.BlockSpec((B, S, E), full3),         # encoder combined
            pl.BlockSpec((B, 1, S), full3),         # additive padding mask
            pl.BlockSpec((E, C), full2),            # embed2inchannels W
            pl.BlockSpec((1, C), full2),            # embed2inchannels b
            pl.BlockSpec((1, K * C, C), perl),      # conv W (GLU half a)
            pl.BlockSpec((1, K * C, C), perl),      # conv W (GLU half b)
            pl.BlockSpec((1, 1, C), perl),          # conv b (half a)
            pl.BlockSpec((1, 1, C), perl),          # conv b (half b)
            pl.BlockSpec((1, C, E), perl),          # attn linear_in W
            pl.BlockSpec((1, 1, E), perl),          # attn linear_in b
            pl.BlockSpec((1, E, C), perl),          # attn linear_out W
            pl.BlockSpec((1, 1, C), perl),          # attn linear_out b
        ],
        out_specs=pl.BlockSpec((N, C), full2),
        out_shape=jax.ShapeDtypeStruct((N, C), jnp.float32),
        scratch_shapes=[pltpu.VMEM((N, C), jnp.float32)],
        compiler_params=pltpu.CompilerParams(dimension_semantics=("arbitrary",)),
        cost_estimate=pl.CostEstimate(flops=flops, transcendentals=transcendentals,
                                      bytes_accessed=bytes_accessed),
    )(emb2d, encc, encz, addmask, w_e2c.astype(compute_dtype), b_e2c.reshape(1, C),
      wca, wcb, bca, bcb, w_in, b_in, w_out, b_out)


# --------------------------------------------------------------------------
# Fused output head: inchannels2embed + linear_out, vocab-tiled
# --------------------------------------------------------------------------

def decoder_head(x2d, w_c2e, b_c2e, w_lo, b_lo, compute_dtype, tile_v=2048):
    N, C = x2d.shape
    E = w_c2e.shape[1]
    V = w_lo.shape[1]
    if V <= tile_v:
        tn, Vp = V, V
        w_lo_p, b_lo_p = w_lo, b_lo
    else:
        tn = tile_v                                   # multiple of 128: lane-dense output tiles
        Vp = ((V + tn - 1) // tn) * tn
        w_lo_p = jnp.pad(w_lo, ((0, 0), (0, Vp - V)))
        b_lo_p = jnp.pad(b_lo, ((0, Vp - V),))
    nv = Vp // tn

    def kernel(x_ref, wce_ref, bce_ref, wlo_ref, blo_ref, o_ref, conv_sc):
        @pl.when(pl.program_id(0) == 0)
        def _():
            # inchannels2embed computed once; (N, E) intermediate stays in VMEM scratch
            conv_sc[...] = jnp.dot(x_ref[...].astype(compute_dtype), wce_ref[...],
                                   preferred_element_type=jnp.float32) + bce_ref[...]
        o_ref[...] = jnp.dot(conv_sc[...].astype(compute_dtype), wlo_ref[...],
                             preferred_element_type=jnp.float32) + blo_ref[...]

    flops = 2 * N * C * E + 2 * N * E * Vp
    bytes_accessed = 4 * N * C + 2 * (C * E + E * Vp) + 4 * (E + Vp) + 4 * N * Vp

    out = pl.pallas_call(
        kernel,
        grid=(nv,),
        in_specs=[
            pl.BlockSpec((N, C), lambda j: (0, 0)),
            pl.BlockSpec((C, E), lambda j: (0, 0)),
            pl.BlockSpec((1, E), lambda j: (0, 0)),
            pl.BlockSpec((E, tn), lambda j: (0, j)),   # vocab weight streamed tile by tile
            pl.BlockSpec((1, tn), lambda j: (0, j)),
        ],
        out_specs=pl.BlockSpec((N, tn), lambda j: (0, j)),
        out_shape=jax.ShapeDtypeStruct((N, Vp), jnp.float32),
        scratch_shapes=[pltpu.VMEM((N, E), jnp.float32)],
        compiler_params=pltpu.CompilerParams(
            dimension_semantics=("arbitrary",),
            vmem_limit_bytes=64 * 1024 * 1024),
        cost_estimate=pl.CostEstimate(flops=flops, transcendentals=0,
                                      bytes_accessed=bytes_accessed),
    )(x2d, w_c2e.astype(compute_dtype), b_c2e.reshape(1, E),
      w_lo_p.astype(compute_dtype), b_lo_p.reshape(1, Vp))
    return out[:, :V] if Vp != V else out


# --------------------------------------------------------------------------
# Fallback path (heterogeneous layer stacks): still fully batched per call
# --------------------------------------------------------------------------

def linear(x2d, w, b, compute_dtype=jnp.bfloat16):
    """y = x @ w + b for small projections (the vocab projection uses decoder_head)."""
    n, _ = x2d.shape
    dout = w.shape[1]

    def kernel(x_ref, w_ref, b_ref, o_ref):
        o_ref[...] = jnp.dot(x_ref[...].astype(compute_dtype), w_ref[...],
                             preferred_element_type=jnp.float32) + b_ref[...]

    return pl.pallas_call(kernel, out_shape=jax.ShapeDtypeStruct((n, dout), jnp.float32),
                          )(x2d, w.astype(compute_dtype), b.reshape(1, dout))


def decoder_layer(x2d, res2d, use_residual, emb2d, encc, encz, addmask,
                  w_conv, b_conv, w_in, b_in, w_out, b_out, padding_idx, compute_dtype):
    """General single-layer kernel (used only when the stack is not homogeneous)."""
    B, S, E = encc.shape
    N, Cin = x2d.shape
    T = N // B
    K = w_conv.shape[0]
    Cout = w_conv.shape[2] // 2
    pad_value = float(padding_idx)

    wca = w_conv[:, :, :Cout].reshape(K * Cin, Cout).astype(compute_dtype)
    wcb = w_conv[:, :, Cout:].reshape(K * Cin, Cout).astype(compute_dtype)
    bca = b_conv[:Cout].reshape(1, Cout)
    bcb = b_conv[Cout:].reshape(1, Cout)

    def kernel(x_ref, res_ref, emb_ref, encc_ref, encz_ref, mask_ref,
               wca_ref, wcb_ref, bca_ref, bcb_ref, win_ref, bin_ref, wout_ref, bout_ref,
               o_ref):
        x_attn = _conv_glu_attn(
            x_ref[...], emb_ref[...], encc_ref[...], encz_ref[...], mask_ref[...],
            wca_ref[...], wcb_ref[...], bca_ref[...], bcb_ref[...],
            win_ref[...], bin_ref[...], wout_ref[...], bout_ref[...],
            pad_value=pad_value, B=B, T=T, K=K, compute_dtype=compute_dtype)
        if use_residual:
            o_ref[...] = (x_attn + res_ref[...]) * SQRT_HALF
        else:
            o_ref[...] = x_attn          # residual == 0: no add, no sqrt(0.5) scale

    return pl.pallas_call(kernel, out_shape=jax.ShapeDtypeStruct((N, Cout), jnp.float32))(
        x2d, res2d, emb2d, encc, encz, addmask,
        wca, wcb, bca, bcb,
        w_in.astype(compute_dtype), b_in.reshape(1, E),
        w_out.astype(compute_dtype), b_out.reshape(1, Cout))


# --------------------------------------------------------------------------
# Parameter construction + forward pass (glue in plain JAX)
# --------------------------------------------------------------------------

def extend_conv_spec(convolutions):
    extended = []
    for spec in convolutions:
        if len(spec) == 3:
            extended.append(spec)
        elif len(spec) == 2:
            extended.append(spec + (1,))
        else:
            raise ValueError("invalid conv spec " + str(spec))
    return tuple(extended)


def make_decoder_params(key, vocab_size, embed_dim, convolutions, max_positions, padding_idx):
    """Deterministic synthetic initialization with shapes matching Decoder.__init__."""
    convolutions = extend_conv_spec(convolutions)
    in_channels = convolutions[0][0]

    keys = iter(jax.random.split(key, 8 * len(convolutions) + 16))
    nrm = lambda shape, s=0.1: (s * jax.random.normal(next(keys), shape)).astype(jnp.float32)

    params = {}
    params["embed_tokens"] = nrm((vocab_size, embed_dim)).at[padding_idx].set(0.0)
    # learned positional embedding table, fairseq-style (positions start at padding_idx + 1)
    params["embed_positions"] = nrm((max_positions + padding_idx + 1, embed_dim)
                                    ).at[padding_idx].set(0.0)
    params["embed2inchannels"] = (nrm((embed_dim, in_channels)), nrm((in_channels,)))

    layers = []
    layer_in_channels = [in_channels]
    cur_in = in_channels
    for (out_channels, kernel_size, residual) in convolutions:
        residual_dim = out_channels if residual == 0 else layer_in_channels[-residual]
        proj = None
        if residual_dim != out_channels:
            proj = (nrm((residual_dim, out_channels)), nrm((out_channels,)))
        layers.append({
            "proj": proj,
            "residual": residual,
            "kernel_size": kernel_size,
            # conv weight stored channels-last as (K, Cin, 2*Cout)
            "w_conv": nrm((kernel_size, cur_in, out_channels * 2)),
            "b_conv": nrm((out_channels * 2,)),
            "attn_w_in": nrm((out_channels, embed_dim)),
            "attn_b_in": nrm((embed_dim,)),
            "attn_w_out": nrm((embed_dim, out_channels)),
            "attn_b_out": nrm((out_channels,)),
        })
        cur_in = out_channels
        layer_in_channels.append(out_channels)

    params["layers"] = layers
    params["inchannels2embed"] = (nrm((cur_in, embed_dim)), nrm((embed_dim,)))
    params["linear_out"] = (nrm((embed_dim, vocab_size)), nrm((vocab_size,)))
    return params


def _stack_is_homogeneous(params):
    layers = params["layers"]
    if not layers:
        return False
    k0 = layers[0]["kernel_size"]
    r0 = layers[0]["residual"]
    c0 = layers[0]["w_conv"].shape[2] // 2
    if r0 not in (0, 1):
        return False
    for l in layers:
        if (l["kernel_size"] != k0 or l["residual"] != r0 or l["proj"] is not None
                or l["w_conv"].shape[2] // 2 != c0 or l["w_conv"].shape[1] != c0):
            return False
    return True


def decoder_forward(params, trg_tokens, encoder_out, src_tokens, padding_idx,
                    compute_dtype=jnp.bfloat16):
    """Returns outputs: (B, T, vocab_size). Eval mode (dropout = identity)."""
    encoder_conved, encoder_combined = encoder_out
    B, T = trg_tokens.shape

    # --- embeddings (token gathers stay in plain JAX glue) --------------------
    # TODO(synk): assumes fairseq LearnedPositionalEmbedding (non-pad cumsum positions);
    # embedding gathers and dropout (identity in eval) have no in-kernel Pallas equivalent.
    tok_emb = jnp.take(params["embed_tokens"], trg_tokens, axis=0)            # (B, T, E)
    nonpad = (trg_tokens != padding_idx).astype(jnp.int32)
    positions = jnp.cumsum(nonpad, axis=1) * nonpad + padding_idx
    positions = jnp.clip(positions, 0, params["embed_positions"].shape[0] - 1)
    pos_emb = jnp.take(params["embed_positions"], positions, axis=0)          # (B, T, E)
    embedded = (tok_emb + pos_emb).astype(jnp.float32)
    E = embedded.shape[-1]
    N = B * T

    # additive attention mask: -1e30 where source token is PAD, else 0
    addmask = jnp.where(src_tokens == padding_idx, NEG_INF, 0.0
                        ).astype(jnp.float32)[:, None, :]                     # (B, 1, S)
    encc = encoder_conved.astype(compute_dtype)
    encz = encoder_combined.astype(compute_dtype)

    if _stack_is_homogeneous(params):
        # one fused kernel: embed2inchannels + all decoder layers, x resident in VMEM
        x2d = decoder_stack(embedded, encc, encz, addmask, params, padding_idx, compute_dtype)
    else:
        # general fallback: one (batched) kernel per layer
        w_e2c, b_e2c = params["embed2inchannels"]
        emb2d = embedded.reshape(N, E)
        x2d = linear(emb2d, w_e2c, b_e2c, compute_dtype)
        residuals = [x2d]
        for layer in params["layers"]:
            r = layer["residual"]
            if r > 0:
                res2d = residuals[-r]
                if layer["proj"] is not None:
                    wp, bp = layer["proj"]
                    res2d = linear(res2d, wp, bp, compute_dtype)
                use_res = True
            else:
                res2d, use_res = x2d, False   # res2d unused when use_res is False
            x2d = decoder_layer(x2d, res2d, use_res, emb2d, encc, encz, addmask,
                                layer["w_conv"], layer["b_conv"],
                                layer["attn_w_in"], layer["attn_b_in"],
                                layer["attn_w_out"], layer["attn_b_out"],
                                padding_idx, compute_dtype)
            residuals.append(x2d)

    # fused output head: inchannels2embed + linear_out (vocab-tiled)
    w_c2e, b_c2e = params["inchannels2embed"]
    w_lo, b_lo = params["linear_out"]
    out = decoder_head(x2d, w_c2e, b_c2e, w_lo, b_lo, compute_dtype)
    return out.reshape(B, T, -1)


# --------------------------------------------------------------------------
# Example run
# --------------------------------------------------------------------------

if __name__ == "__main__":
    B, T, S = 2, 8, 10
    embed_dim = 32
    vocab_size = 20
    padding_idx = 1
    max_positions = 64
    convolutions = ((32, 3),) * 2

    key = jax.random.PRNGKey(0)
    k_par, k_trg, k_src, k_ec, k_ez = jax.random.split(key, 5)

    params = make_decoder_params(k_par, vocab_size, embed_dim, convolutions,
                                 max_positions, padding_idx)

    trg_tokens = jax.random.randint(k_trg, (B, T), 2, vocab_size, dtype=jnp.int32)
    src_tokens = jax.random.randint(k_src, (B, S), 2, vocab_size, dtype=jnp.int32)
    src_tokens = src_tokens.at[:, -2:].set(padding_idx)   # some (not all) src tokens are PAD

    encoder_conved = jax.random.normal(k_ec, (B, S, embed_dim), dtype=jnp.float32)
    encoder_combined = jax.random.normal(k_ez, (B, S, embed_dim), dtype=jnp.float32)

    outputs = decoder_forward(params, trg_tokens, (encoder_conved, encoder_combined),
                              src_tokens, padding_idx)
    outputs = jax.block_until_ready(outputs)
    assert outputs.shape == (B, T, vocab_size)
    assert bool(jnp.all(jnp.isfinite(outputs)))
    print("KERNEL_OK")
</pallas_src>

<mosaic_0001>
module attributes {stable_mosaic.version = 11 : i64} {
  func.func @kernel(%arg0: i32, %arg1: memref<16x32xf32, #tpu.memory_space<vmem>>, %arg2: memref<2x10x32xbf16, #tpu.memory_space<vmem>>, %arg3: memref<2x10x32xbf16, #tpu.memory_space<vmem>>, %arg4: memref<2x1x10xf32, #tpu.memory_space<vmem>>, %arg5: memref<32x32xbf16, #tpu.memory_space<vmem>>, %arg6: memref<1x32xf32, #tpu.memory_space<vmem>>, %arg7: memref<1x96x32xbf16, #tpu.memory_space<vmem>>, %arg8: memref<1x96x32xbf16, #tpu.memory_space<vmem>>, %arg9: memref<1x1x32xf32, #tpu.memory_space<vmem>>, %arg10: memref<1x1x32xf32, #tpu.memory_space<vmem>>, %arg11: memref<1x32x32xbf16, #tpu.memory_space<vmem>>, %arg12: memref<1x1x32xf32, #tpu.memory_space<vmem>>, %arg13: memref<1x32x32xbf16, #tpu.memory_space<vmem>>, %arg14: memref<1x1x32xf32, #tpu.memory_space<vmem>>, %arg15: memref<16x32xf32, #tpu.memory_space<vmem>>, %arg16: memref<16x32xf32, #tpu.memory_space<vmem>>) attributes {dimension_semantics = [#tpu.dimension_semantics<arbitrary>], iteration_bounds = array<i64: 2>, scalar_prefetch = 0 : i64, scratch_operands = 1 : i64, tpu.core_type = #tpu.core_type<tc>, window_params = [{pipeline_mode = #tpu.pipeline_mode<synchronous>, transform_indices = @transform_0, window_bounds = array<i64: 16, 32>}, {pipeline_mode = #tpu.pipeline_mode<synchronous>, transform_indices = @transform_1, window_bounds = array<i64: 2, 10, 32>}, {pipeline_mode = #tpu.pipeline_mode<synchronous>, transform_indices = @transform_2, window_bounds = array<i64: 2, 10, 32>}, {pipeline_mode = #tpu.pipeline_mode<synchronous>, transform_indices = @transform_3, window_bounds = array<i64: 2, 1, 10>}, {pipeline_mode = #tpu.pipeline_mode<synchronous>, transform_indices = @transform_4, window_bounds = array<i64: 32, 32>}, {pipeline_mode = #tpu.pipeline_mode<synchronous>, transform_indices = @transform_5, window_bounds = array<i64: 1, 32>}, {transform_indices = @transform_6, window_bounds = array<i64: 1, 96, 32>}, {transform_indices = @transform_7, window_bounds = array<i64: 1, 96, 32>}, {transform_indices = @transform_8, window_bounds = array<i64: 1, 1, 32>}, {transform_indices = @transform_9, window_bounds = array<i64: 1, 1, 32>}, {transform_indices = @transform_10, window_bounds = array<i64: 1, 32, 32>}, {transform_indices = @transform_11, window_bounds = array<i64: 1, 1, 32>}, {transform_indices = @transform_12, window_bounds = array<i64: 1, 32, 32>}, {transform_indices = @transform_13, window_bounds = array<i64: 1, 1, 32>}, {pipeline_mode = #tpu.pipeline_mode<synchronous>, transform_indices = @transform_14, window_bounds = array<i64: 16, 32>}]} {
    %c0_i32 = arith.constant 0 : i32
    %0 = arith.cmpi eq, %arg0, %c0_i32 : i32
    %1 = arith.extui %0 : i1 to i32
    %c0_i32_0 = arith.constant 0 : i32
    %2 = arith.cmpi ne, %1, %c0_i32_0 : i32
    scf.if %2 {
      %c0_52 = arith.constant 0 : index
      %c0_53 = arith.constant 0 : index
      %84 = vector.load %arg1[%c0_52, %c0_53] : memref<16x32xf32, #tpu.memory_space<vmem>>, vector<16x32xf32>
      %85 = arith.truncf %84 : vector<16x32xf32> to vector<16x32xbf16>
      %c0_54 = arith.constant 0 : index
      %c0_55 = arith.constant 0 : index
      %86 = vector.load %arg5[%c0_54, %c0_55] : memref<32x32xbf16, #tpu.memory_space<vmem>>, vector<32x32xbf16>
      %cst_56 = arith.constant dense<0.000000e+00> : vector<16x32xf32>
      %87 = tpu.matmul %85, %86, %cst_56 {dimension_numbers = #tpu.dot_dimension_numbers<[1], [0], [0], [1], [0, 0, 1, 1], [], []>} : vector<16x32xbf16>, vector<32x32xbf16>, vector<16x32xf32> -> vector<16x32xf32>
      %c0_57 = arith.constant 0 : index
      %c0_58 = arith.constant 0 : index
      %88 = vector.load %arg6[%c0_57, %c0_58] : memref<1x32xf32, #tpu.memory_space<vmem>>, vector<1x32xf32>
      %89 = vector.broadcast %88 : vector<1x32xf32> to vector<16x32xf32>
      %90 = arith.addf %87, %89 : vector<16x32xf32>
      %c0_59 = arith.constant 0 : index
      %c0_60 = arith.constant 0 : index
      %91 = vector.load %arg16[%c0_59, %c0_60] : memref<16x32xf32, #tpu.memory_space<vmem>>, vector<16x32xf32>
      tpu.vector_store %arg16[%c0_59, %c0_60], %90 {strides = array<i32>} : memref<16x32xf32, #tpu.memory_space<vmem>>, vector<16x32xf32>,
    } else {
    }
    %c0 = arith.constant 0 : index
    %c0_1 = arith.constant 0 : index
    %3 = vector.load %arg16[%c0, %c0_1] : memref<16x32xf32, #tpu.memory_space<vmem>>, vector<16x32xf32>
    %c0_2 = arith.constant 0 : index
    %c0_3 = arith.constant 0 : index
    %4 = vector.load %arg1[%c0_2, %c0_3] : memref<16x32xf32, #tpu.memory_space<vmem>>, vector<16x32xf32>
    %c0_4 = arith.constant 0 : index
    %c0_5 = arith.constant 0 : index
    %c0_6 = arith.constant 0 : index
    %5 = vector.load %arg2[%c0_4, %c0_5, %c0_6] : memref<2x10x32xbf16, #tpu.memory_space<vmem>>, vector<2x10x32xbf16>
    %c0_7 = arith.constant 0 : index
    %c0_8 = arith.constant 0 : index
    %c0_9 = arith.constant 0 : index
    %6 = vector.load %arg3[%c0_7, %c0_8, %c0_9] : memref<2x10x32xbf16, #tpu.memory_space<vmem>>, vector<2x10x32xbf16>
    %c0_10 = arith.constant 0 : index
    %c0_11 = arith.constant 0 : index
    %c0_12 = arith.constant 0 : index
    %7 = vector.load %arg4[%c0_10, %c0_11, %c0_12] : memref<2x1x10xf32, #tpu.memory_space<vmem>>, vector<2x1x10xf32>
    %c0_13 = arith.constant 0 : index
    %c0_14 = arith.constant 0 : index
    %c0_15 = arith.constant 0 : index
    %8 = vector.load %arg7[%c0_13, %c0_14, %c0_15] : memref<1x96x32xbf16, #tpu.memory_space<vmem>>, vector<1x96x32xbf16>
    %9 = vector.shape_cast %8 : vector<1x96x32xbf16> to vector<96x32xbf16>
    %c0_16 = arith.constant 0 : index
    %c0_17 = arith.constant 0 : index
    %c0_18 = arith.constant 0 : index
    %10 = vector.load %arg8[%c0_16, %c0_17, %c0_18] : memref<1x96x32xbf16, #tpu.memory_space<vmem>>, vector<1x96x32xbf16>
    %11 = vector.shape_cast %10 : vector<1x96x32xbf16> to vector<96x32xbf16>
    %c0_19 = arith.constant 0 : index
    %c0_20 = arith.constant 0 : index
    %c0_21 = arith.constant 0 : index
    %12 = vector.load %arg9[%c0_19, %c0_20, %c0_21] : memref<1x1x32xf32, #tpu.memory_space<vmem>>, vector<1x1x32xf32>
    %13 = vector.shape_cast %12 : vector<1x1x32xf32> to vector<1x32xf32>
    %c0_22 = arith.constant 0 : index
    %c0_23 = arith.constant 0 : index
    %c0_24 = arith.constant 0 : index
    %14 = vector.load %arg10[%c0_22, %c0_23, %c0_24] : memref<1x1x32xf32, #tpu.memory_space<vmem>>, vector<1x1x32xf32>
    %15 = vector.shape_cast %14 : vector<1x1x32xf32> to vector<1x32xf32>
    %c0_25 = arith.constant 0 : index
    %c0_26 = arith.constant 0 : index
    %c0_27 = arith.constant 0 : index
    %16 = vector.load %arg11[%c0_25, %c0_26, %c0_27] : memref<1x32x32xbf16, #tpu.memory_space<vmem>>, vector<1x32x32xbf16>
    %17 = vector.shape_cast %16 : vector<1x32x32xbf16> to vector<32x32xbf16>
    %c0_28 = arith.constant 0 : index
    %c0_29 = arith.constant 0 : index
    %c0_30 = arith.constant 0 : index
    %18 = vector.load %arg12[%c0_28, %c0_29, %c0_30] : memref<1x1x32xf32, #tpu.memory_space<vmem>>, vector<1x1x32xf32>
    %19 = vector.shape_cast %18 : vector<1x1x32xf32> to vector<1x32xf32>
    %c0_31 = arith.constant 0 : index
    %c0_32 = arith.constant 0 : index
    %c0_33 = arith.constant 0 : index
    %20 = vector.load %arg13[%c0_31, %c0_32, %c0_33] : memref<1x32x32xbf16, #tpu.memory_space<vmem>>, vector<1x32x32xbf16>
    %21 = vector.shape_cast %20 : vector<1x32x32xbf16> to vector<32x32xbf16>
    %c0_34 = arith.constant 0 : index
    %c0_35 = arith.constant 0 : index
    %c0_36 = arith.constant 0 : index
    %22 = vector.load %arg14[%c0_34, %c0_35, %c0_36] : memref<1x1x32xf32, #tpu.memory_space<vmem>>, vector<1x1x32xf32>
    %23 = vector.shape_cast %22 : vector<1x1x32xf32> to vector<1x32xf32>
    %24 = vector.shape_cast %3 : vector<16x32xf32> to vector<2x8x32xf32>
    %cst = arith.constant 1.000000e+00 : f32
    %25 = vector.broadcast %cst : f32 to vector<2x2x32xf32>
    %26 = tpu.concatenate %25, %24 in 1 : vector<2x2x32xf32>, vector<2x8x32xf32> -> vector<2x10x32xf32>
    %27 = vector.extract_strided_slice %26 {offsets = [0, 0, 0], sizes = [2, 8, 32], strides = [1, 1, 1]} : vector<2x10x32xf32> to vector<2x8x32xf32>
    %28 = vector.extract_strided_slice %26 {offsets = [0, 1, 0], sizes = [2, 8, 32], strides = [1, 1, 1]} : vector<2x10x32xf32> to vector<2x8x32xf32>
    %29 = vector.extract_strided_slice %26 {offsets = [0, 2, 0], sizes = [2, 8, 32], strides = [1, 1, 1]} : vector<2x10x32xf32> to vector<2x8x32xf32>
    %30 = tpu.concatenate %27, %28, %29 in 2 : vector<2x8x32xf32>, vector<2x8x32xf32>, vector<2x8x32xf32> -> vector<2x8x96xf32>
    %31 = vector.shape_cast %30 : vector<2x8x96xf32> to vector<16x96xf32>
    %32 = arith.truncf %31 : vector<16x96xf32> to vector<16x96xbf16>
    %cst_37 = arith.constant dense<0.000000e+00> : vector<16x32xf32>
    %33 = tpu.matmul %32, %9, %cst_37 {dimension_numbers = #tpu.dot_dimension_numbers<[1], [0], [0], [1], [0, 0, 1, 1], [], []>} : vector<16x96xbf16>, vector<96x32xbf16>, vector<16x32xf32> -> vector<16x32xf32>
    %34 = vector.broadcast %13 : vector<1x32xf32> to vector<16x32xf32>
    %35 = arith.addf %33, %34 : vector<16x32xf32>
    %cst_38 = arith.constant dense<0.000000e+00> : vector<16x32xf32>
    %36 = tpu.matmul %32, %11, %cst_38 {dimension_numbers = #tpu.dot_dimension_numbers<[1], [0], [0], [1], [0, 0, 1, 1], [], []>} : vector<16x96xbf16>, vector<96x32xbf16>, vector<16x32xf32> -> vector<16x32xf32>
    %37 = vector.broadcast %15 : vector<1x32xf32> to vector<16x32xf32>
    %38 = arith.addf %36, %37 : vector<16x32xf32>
    %39 = arith.negf %38 : vector<16x32xf32>
    %40 = math.exp %39 : vector<16x32xf32>
    %cst_39 = arith.constant 1.000000e+00 : f32
    %41 = vector.broadcast %cst_39 : f32 to vector<16x32xf32>
    %42 = arith.addf %41, %40 : vector<16x32xf32>
    %43 = arith.divf %41, %42 : vector<16x32xf32>
    %44 = arith.mulf %35, %43 : vector<16x32xf32>
    %45 = arith.truncf %44 : vector<16x32xf32> to vector<16x32xbf16>
    %cst_40 = arith.constant dense<0.000000e+00> : vector<16x32xf32>
    %46 = tpu.matmul %45, %17, %cst_40 {dimension_numbers = #tpu.dot_dimension_numbers<[1], [0], [0], [1], [0, 0, 1, 1], [], []>} : vector<16x32xbf16>, vector<32x32xbf16>, vector<16x32xf32> -> vector<16x32xf32>
    %47 = vector.broadcast %19 : vector<1x32xf32> to vector<16x32xf32>
    %48 = arith.addf %46, %47 : vector<16x32xf32>
    %49 = arith.addf %48, %4 : vector<16x32xf32>
    %cst_41 = arith.constant 0.707106769 : f32
    %50 = vector.broadcast %cst_41 : f32 to vector<16x32xf32>
    %51 = arith.mulf %49, %50 : vector<16x32xf32>
    %52 = vector.shape_cast %51 : vector<16x32xf32> to vector<2x8x32xf32>
    %53 = arith.truncf %52 : vector<2x8x32xf32> to vector<2x8x32xbf16>
    %cst_42 = arith.constant dense<0.000000e+00> : vector<2x8x10xf32>
    %54 = tpu.matmul %53, %5, %cst_42 {dimension_numbers = #tpu.dot_dimension_numbers<[2], [2], [1], [1], [0, 0, 0, 1, 1, 1], [0], [0]>} : vector<2x8x32xbf16>, vector<2x10x32xbf16>, vector<2x8x10xf32> -> vector<2x8x10xf32>
    %55 = vector.broadcast %7 : vector<2x1x10xf32> to vector<2x8x10xf32>
    %56 = arith.addf %54, %55 : vector<2x8x10xf32>
    %cst_43 = arith.constant dense<0xFF800000> : vector<2x8xf32>
    %57 = vector.multi_reduction <maximumf>, %56, %cst_43 [2] : vector<2x8x10xf32> to vector<2x8xf32>
    %58 = vector.shape_cast %57 : vector<2x8xf32> to vector<2x8x1xf32>
    %59 = vector.broadcast %58 : vector<2x8x1xf32> to vector<2x8x10xf32>
    %60 = arith.subf %56, %59 : vector<2x8x10xf32>
    %61 = math.exp %60 : vector<2x8x10xf32>
    %cst_44 = arith.constant dense<0.000000e+00> : vector<2x8xf32>
    %62 = vector.multi_reduction <add>, %61, %cst_44 [2] : vector<2x8x10xf32> to vector<2x8xf32>
    %63 = vector.shape_cast %62 : vector<2x8xf32> to vector<2x8x1xf32>
    %64 = tpu.reciprocal %63 {approx = true} : vector<2x8x1xf32> -> vector<2x8x1xf32>
    %65 = vector.broadcast %64 : vector<2x8x1xf32> to vector<2x8x10xf32>
    %66 = arith.mulf %61, %65 : vector<2x8x10xf32>
    %67 = arith.truncf %66 : vector<2x8x10xf32> to vector<2x8x10xbf16>
    %cst_45 = arith.constant dense<0.000000e+00> : vector<2x8x32xf32>
    %68 = tpu.matmul %67, %6, %cst_45 {dimension_numbers = #tpu.dot_dimension_numbers<[2], [1], [1], [2], [0, 0, 0, 1, 1, 2], [0], [0]>} : vector<2x8x10xbf16>, vector<2x10x32xbf16>, vector<2x8x32xf32> -> vector<2x8x32xf32>
    %69 = vector.shape_cast %68 : vector<2x8x32xf32> to vector<16x32xf32>
    %70 = arith.truncf %69 : vector<16x32xf32> to vector<16x32xbf16>
    %cst_46 = arith.constant dense<0.000000e+00> : vector<16x32xf32>
    %71 = tpu.matmul %70, %21, %cst_46 {dimension_numbers = #tpu.dot_dimension_numbers<[1], [0], [0], [1], [0, 0, 1, 1], [], []>} : vector<16x32xbf16>, vector<32x32xbf16>, vector<16x32xf32> -> vector<16x32xf32>
    %72 = vector.broadcast %23 : vector<1x32xf32> to vector<16x32xf32>
    %73 = arith.addf %71, %72 : vector<16x32xf32>
    %74 = arith.addf %44, %73 : vector<16x32xf32>
    %cst_47 = arith.constant 0.707106769 : f32
    %75 = vector.broadcast %cst_47 : f32 to vector<16x32xf32>
    %76 = arith.mulf %74, %75 : vector<16x32xf32>
    %77 = arith.addf %76, %3 : vector<16x32xf32>
    %cst_48 = arith.constant 0.707106769 : f32
    %78 = vector.broadcast %cst_48 : f32 to vector<16x32xf32>
    %79 = arith.mulf %77, %78 : vector<16x32xf32>
    %c0_49 = arith.constant 0 : index
    %c0_50 = arith.constant 0 : index
    %80 = vector.load %arg16[%c0_49, %c0_50] : memref<16x32xf32, #tpu.memory_space<vmem>>, vector<16x32xf32>
    tpu.vector_store %arg16[%c0_49, %c0_50], %79 {strides = array<i32>} : memref<16x32xf32, #tpu.memory_space<vmem>>, vector<16x32xf32>,
    %c1_i32 = arith.constant 1 : i32
    %81 = arith.cmpi eq, %arg0, %c1_i32 : i32
    %82 = arith.extui %81 : i1 to i32
    %c0_i32_51 = arith.constant 0 : i32
    %83 = arith.cmpi ne, %82, %c0_i32_51 : i32
    scf.if %83 {
      %c0_52 = arith.constant 0 : index
      %c0_53 = arith.constant 0 : index
      %84 = vector.load %arg15[%c0_52, %c0_53] : memref<16x32xf32, #tpu.memory_space<vmem>>, vector<16x32xf32>
      tpu.vector_store %arg15[%c0_52, %c0_53], %79 {strides = array<i32>} : memref<16x32xf32, #tpu.memory_space<vmem>>, vector<16x32xf32>,
    } else {
    }
    return
  }
  func.func @transform_0(%arg0: i32) -> (i32, i32) {
    %c0_i32 = arith.constant 0 : i32
    %c0_i32_0 = arith.constant 0 : i32
    %c0_i32_1 = arith.constant 0 : i32
    return %c0_i32, %c0_i32_0 : i32, i32
  }
  func.func @transform_1(%arg0: i32) -> (i32, i32, i32) {
    %c0_i32 = arith.constant 0 : i32
    %c0_i32_0 = arith.constant 0 : i32
    %c0_i32_1 = arith.constant 0 : i32
    %c0_i32_2 = arith.constant 0 : i32
    return %c0_i32, %c0_i32_0, %c0_i32_1 : i32, i32, i32
  }
  func.func @transform_2(%arg0: i32) -> (i32, i32, i32) {
    %c0_i32 = arith.constant 0 : i32
    %c0_i32_0 = arith.constant 0 : i32
    %c0_i32_1 = arith.constant 0 : i32
    %c0_i32_2 = arith.constant 0 : i32
    return %c0_i32, %c0_i32_0, %c0_i32_1 : i32, i32, i32
  }
  func.func @transform_3(%arg0: i32) -> (i32, i32, i32) {
    %c0_i32 = arith.constant 0 : i32
    %c0_i32_0 = arith.constant 0 : i32
    %c0_i32_1 = arith.constant 0 : i32
    %c0_i32_2 = arith.constant 0 : i32
    return %c0_i32, %c0_i32_0, %c0_i32_1 : i32, i32, i32
  }
  func.func @transform_4(%arg0: i32) -> (i32, i32) {
    %c0_i32 = arith.constant 0 : i32
    %c0_i32_0 = arith.constant 0 : i32
    %c0_i32_1 = arith.constant 0 : i32
    return %c0_i32, %c0_i32_0 : i32, i32
  }
  func.func @transform_5(%arg0: i32) -> (i32, i32) {
    %c0_i32 = arith.constant 0 : i32
    %c0_i32_0 = arith.constant 0 : i32
    %c0_i32_1 = arith.constant 0 : i32
    return %c0_i32, %c0_i32_0 : i32, i32
  }
  func.func @transform_6(%arg0: i32) -> (i32, i32, i32) {
    %c0_i32 = arith.constant 0 : i32
    %c0_i32_0 = arith.constant 0 : i32
    %c0_i32_1 = arith.constant 0 : i32
    return %arg0, %c0_i32, %c0_i32_0 : i32, i32, i32
  }
  func.func @transform_7(%arg0: i32) -> (i32, i32, i32) {
    %c0_i32 = arith.constant 0 : i32
    %c0_i32_0 = arith.constant 0 : i32
    %c0_i32_1 = arith.constant 0 : i32
    return %arg0, %c0_i32, %c0_i32_0 : i32, i32, i32
  }
  func.func @transform_8(%arg0: i32) -> (i32, i32, i32) {
    %c0_i32 = arith.constant 0 : i32
    %c0_i32_0 = arith.constant 0 : i32
    %c0_i32_1 = arith.constant 0 : i32
    return %arg0, %c0_i32, %c0_i32_0 : i32, i32, i32
  }
  func.func @transform_9(%arg0: i32) -> (i32, i32, i32) {
    %c0_i32 = arith.constant 0 : i32
    %c0_i32_0 = arith.constant 0 : i32
    %c0_i32_1 = arith.constant 0 : i32
    return %arg0, %c0_i32, %c0_i32_0 : i32, i32, i32
  }
  func.func @transform_10(%arg0: i32) -> (i32, i32, i32) {
    %c0_i32 = arith.constant 0 : i32
    %c0_i32_0 = arith.constant 0 : i32
    %c0_i32_1 = arith.constant 0 : i32
    return %arg0, %c0_i32, %c0_i32_0 : i32, i32, i32
  }
  func.func @transform_11(%arg0: i32) -> (i32, i32, i32) {
    %c0_i32 = arith.constant 0 : i32
    %c0_i32_0 = arith.constant 0 : i32
    %c0_i32_1 = arith.constant 0 : i32
    return %arg0, %c0_i32, %c0_i32_0 : i32, i32, i32
  }
  func.func @transform_12(%arg0: i32) -> (i32, i32, i32) {
    %c0_i32 = arith.constant 0 : i32
    %c0_i32_0 = arith.constant 0 : i32
    %c0_i32_1 = arith.constant 0 : i32
    return %arg0, %c0_i32, %c0_i32_0 : i32, i32, i32
  }
  func.func @transform_13(%arg0: i32) -> (i32, i32, i32) {
    %c0_i32 = arith.constant 0 : i32
    %c0_i32_0 = arith.constant 0 : i32
    %c0_i32_1 = arith.constant 0 : i32
    return %arg0, %c0_i32, %c0_i32_0 : i32, i32, i32
  }
  func.func @transform_14(%arg0: i32) -> (i32, i32) {
    %c0_i32 = arith.constant 0 : i32
    %c0_i32_0 = arith.constant 0 : i32
    %c0_i32_1 = arith.constant 0 : i32
    return %c0_i32, %c0_i32_0 : i32, i32
  }
}

</mosaic_0001>

<llo_original>
// kernel: tpu_custom_call.1
$region0: #{tpu_custom_call.1}
  #allocation0 [shape = 'u32[]', space=smem, size = 0x4, offset = 0x4, fixed_abs, tag = 'smem constant byte address 0x4 - core index']
  #allocation1 [shape = 'u32[72,128]{1,0:T(1,128)}', space=vmem, size = 0x9000, scoped, tag = 'internal scratch']
  #allocation2 [shape = 'f32[16,32]{1,0:T(8,128)}', space=vmem, size = 0x2000, scoped, tag = 'scratch operand']
  %s0 = inlined_call_operand.vmem [shape: f32[16,32], index: 0, kind: input, shape index: {}]
  %s1 = inlined_call_operand.vmem [shape: bf16[2,10,32], index: 1, kind: input, shape index: {}]
  %s2 = inlined_call_operand.vmem [shape: bf16[2,10,32], index: 2, kind: input, shape index: {}]
  %s3 = inlined_call_operand.vmem [shape: f32[2,1,10], index: 3, kind: input, shape index: {}]
  %s4 = inlined_call_operand.vmem [shape: bf16[32,32], index: 4, kind: input, shape index: {}]
  %s5 = inlined_call_operand.vmem [shape: f32[1,32], index: 5, kind: input, shape index: {}]
  %s6 = inlined_call_operand.vmem [shape: bf16[2,96,32], index: 6, kind: input, shape index: {}]
  %s7 = inlined_call_operand.vmem [shape: bf16[2,96,32], index: 7, kind: input, shape index: {}]
  %s8 = inlined_call_operand.vmem [shape: f32[2,1,32], index: 8, kind: input, shape index: {}]
  %s9 = inlined_call_operand.vmem [shape: f32[2,1,32], index: 9, kind: input, shape index: {}]
  %s10 = inlined_call_operand.vmem [shape: bf16[2,32,32], index: 10, kind: input, shape index: {}]
  %s11 = inlined_call_operand.vmem [shape: f32[2,1,32], index: 11, kind: input, shape index: {}]
  %s12 = inlined_call_operand.vmem [shape: bf16[2,32,32], index: 12, kind: input, shape index: {}]
  %s13 = inlined_call_operand.vmem [shape: f32[2,1,32], index: 13, kind: input, shape index: {}]
  %s14 = inlined_call_operand.hbm [shape: f32[16,32], index: 14, kind: output, shape index: {}]
  %s15 = sld [smem:[#allocation0]]
  $region97: #{tpu_custom_call.1} parent=0
    _
  %s17 = ssub.s32 1, %s15
  %s18 = scalar_select 0, %s17, %s15
  $region1: #{tpu_custom_call.1} parent=0
    #allocation3 [shape = 'u8[8192]{0}', space=vmem, size = 0x2000, scoped, tag = 'output window, operand 0, single buffered']
    #allocation4 [shape = 's32[2]{0}', space=sflag, size = 0x8, scoped, tag = 'scoped memory for tpu_custom_call.1']
    %19 = vsyncpa [#allocation4], 0
    loop: start=0, step=1, limit=4
    $region2: #{tpu_custom_call.1} parent=1 // loop_pre_header
      _
    $region3: #{tpu_custom_call.1} parent=1 // loop_header
      %s21 = sphi 0, %s25
      %p22 = scmp.ge.s32.totalorder %s21, 4
      %s29 = sphi 0, %s29
      %s31 = sphi 0, %s29
      %s32 = sphi 0, %s31
      %s46 = sphi 0, %s32
      %s50 = sphi 0, %s50
      %s52 = sphi 0, %s50
      %s53 = sphi 0, %s52
      %s67 = sphi 0, %s53
      %s71 = sphi 0, %s71
      %s73 = sphi 0, %s71
      %s74 = sphi 0, %s73
      %s88 = sphi 0, %s74
      %s92 = sphi 0, %s92
      %s94 = sphi 0, %s92
      %s95 = sphi 0, %s94
      %s109 = sphi 0, %s95
      %s113 = sphi 0, %s113
      %s115 = sphi 0, %s113
      %s116 = sphi 0, %s115
      %s130 = sphi 0, %s116
      %s134 = sphi 0, %s134
      %s136 = sphi 0, %s134
      %s137 = sphi 0, %s136
      %s151 = sphi 0, %s137
      %s157 = sphi 0, %s159
      %s160 = sphi 0, %s157
      %s161 = sphi 0, %s160
      %s177 = sphi 0, %s161
      %s183 = sphi 0, %s185
      %s186 = sphi 0, %s183
      %s187 = sphi 0, %s186
      %s203 = sphi 0, %s187
      %s209 = sphi 0, %s211
      %s212 = sphi 0, %s209
      %s213 = sphi 0, %s212
      %s229 = sphi 0, %s213
      %s235 = sphi 0, %s237
      %s238 = sphi 0, %s235
      %s239 = sphi 0, %s238
      %s255 = sphi 0, %s239
      %s261 = sphi 0, %s263
      %s264 = sphi 0, %s261
      %s265 = sphi 0, %s264
      %s281 = sphi 0, %s265
      %s287 = sphi 0, %s289
      %s290 = sphi 0, %s287
      %s291 = sphi 0, %s290
      %s307 = sphi 0, %s291
      %s313 = sphi 0, %s315
      %s316 = sphi 0, %s313
      %s317 = sphi 0, %s316
      %s333 = sphi 0, %s317
      %s339 = sphi 0, %s341
      %s342 = sphi 0, %s339
      %s343 = sphi 0, %s342
      %s359 = sphi 0, %s343
      %s363 = sphi 0, %s363
      %s365 = sphi 0, %s363
      %s366 = sphi 0, %s365
      %s380 = sphi 0, %s366
    $region4: #{tpu_custom_call.1} parent=1 // loop_header_branch
      %24 = sbr.rel (%p22) target = $region8
    $region5: #{tpu_custom_call.1} parent=1 // loop_body
      %s26 = ssub.s32 %s21, 1
      %s27 = ssub.s32 %s21, 2
      %s28 = sadd.s32 %s21, 1
      %s30 = sadd.s32 %s29, 1
      %p33 = scmp.eq.s32.totalorder %s21, 1
      %p34 = scmp.ne.s32.totalorder %s29, %s31
      %p35 = scmp.eq.s32.totalorder %s21, 0
      %p36 = por %p34, %p35
      %p37 = scmp.ne.s32.totalorder %s29, %s31
      %p38 = scmp.eq.s32.totalorder %s26, 1
      %p39 = por %p37, %p38
      %p40 = scmp.ne.s32.totalorder %s31, %s32
      %p41 = scmp.eq.s32.totalorder %s26, 0
      %p42 = por %p40, %p41
      %p43 = scmp.ne.s32.totalorder %s31, %s32
      %p44 = scmp.eq.s32.totalorder %s27, 1
      %p45 = por %p43, %p44
      %p47 = scmp.ne.s32.totalorder %s32, %s46
      %p48 = scmp.eq.s32.totalorder %s27, 0
      %p49 = por %p47, %p48
      %s51 = sadd.s32 %s50, 1
      %p54 = scmp.eq.s32.totalorder %s21, 1
      %p55 = scmp.ne.s32.totalorder %s50, %s52
      %p56 = scmp.eq.s32.totalorder %s21, 0
      %p57 = por %p55, %p56
      %p58 = scmp.ne.s32.totalorder %s50, %s52
      %p59 = scmp.eq.s32.totalorder %s26, 1
      %p60 = por %p58, %p59
      %p61 = scmp.ne.s32.totalorder %s52, %s53
      %p62 = scmp.eq.s32.totalorder %s26, 0
      %p63 = por %p61, %p62
      %p64 = scmp.ne.s32.totalorder %s52, %s53
      %p65 = scmp.eq.s32.totalorder %s27, 1
      %p66 = por %p64, %p65
      %p68 = scmp.ne.s32.totalorder %s53, %s67
      %p69 = scmp.eq.s32.totalorder %s27, 0
      %p70 = por %p68, %p69
      %s72 = sadd.s32 %s71, 1
      %p75 = scmp.eq.s32.totalorder %s21, 1
      %p76 = scmp.ne.s32.totalorder %s71, %s73
      %p77 = scmp.eq.s32.totalorder %s21, 0
      %p78 = por %p76, %p77
      %p79 = scmp.ne.s32.totalorder %s71, %s73
      %p80 = scmp.eq.s32.totalorder %s26, 1
      %p81 = por %p79, %p80
      %p82 = scmp.ne.s32.totalorder %s73, %s74
      %p83 = scmp.eq.s32.totalorder %s26, 0
      %p84 = por %p82, %p83
      %p85 = scmp.ne.s32.totalorder %s73, %s74
      %p86 = scmp.eq.s32.totalorder %s27, 1
      %p87 = por %p85, %p86
      %p89 = scmp.ne.s32.totalorder %s74, %s88
      %p90 = scmp.eq.s32.totalorder %s27, 0
      %p91 = por %p89, %p90
      %s93 = sadd.s32 %s92, 1
      %p96 = scmp.eq.s32.totalorder %s21, 1
      %p97 = scmp.ne.s32.totalorder %s92, %s94
      %p98 = scmp.eq.s32.totalorder %s21, 0
      %p99 = por %p97, %p98
      %p100 = scmp.ne.s32.totalorder %s92, %s94
      %p101 = scmp.eq.s32.totalorder %s26, 1
      %p102 = por %p100, %p101
      %p103 = scmp.ne.s32.totalorder %s94, %s95
      %p104 = scmp.eq.s32.totalorder %s26, 0
      %p105 = por %p103, %p104
      %p106 = scmp.ne.s32.totalorder %s94, %s95
      %p107 = scmp.eq.s32.totalorder %s27, 1
      %p108 = por %p106, %p107
      %p110 = scmp.ne.s32.totalorder %s95, %s109
      %p111 = scmp.eq.s32.totalorder %s27, 0
      %p112 = por %p110, %p111
      %s114 = sadd.s32 %s113, 1
      %p117 = scmp.eq.s32.totalorder %s21, 1
      %p118 = scmp.ne.s32.totalorder %s113, %s115
      %p119 = scmp.eq.s32.totalorder %s21, 0
      %p120 = por %p118, %p119
      %p121 = scmp.ne.s32.totalorder %s113, %s115
      %p122 = scmp.eq.s32.totalorder %s26, 1
      %p123 = por %p121, %p122
      %p124 = scmp.ne.s32.totalorder %s115, %s116
      %p125 = scmp.eq.s32.totalorder %s26, 0
      %p126 = por %p124, %p125
      %p127 = scmp.ne.s32.totalorder %s115, %s116
      %p128 = scmp.eq.s32.totalorder %s27, 1
      %p129 = por %p127, %p128
      %p131 = scmp.ne.s32.totalorder %s116, %s130
      %p132 = scmp.eq.s32.totalorder %s27, 0
      %p133 = por %p131, %p132
      %s135 = sadd.s32 %s134, 1
      %p138 = scmp.eq.s32.totalorder %s21, 1
      %p139 = scmp.ne.s32.totalorder %s134, %s136
      %p140 = scmp.eq.s32.totalorder %s21, 0
      %p141 = por %p139, %p140
      %p142 = scmp.ne.s32.totalorder %s134, %s136
      %p143 = scmp.eq.s32.totalorder %s26, 1
      %p144 = por %p142, %p143
      %p145 = scmp.ne.s32.totalorder %s136, %s137
      %p146 = scmp.eq.s32.totalorder %s26, 0
      %p147 = por %p145, %p146
      %p148 = scmp.ne.s32.totalorder %s136, %s137
      %p149 = scmp.eq.s32.totalorder %s27, 1
      %p150 = por %p148, %p149
      %p152 = scmp.ne.s32.totalorder %s137, %s151
      %p153 = scmp.eq.s32.totalorder %s27, 0
      %p154 = por %p152, %p153
      %s155 = ssub.s32 %s21, %s28
      %p156 = scmp.eq.s32.totalorder %s155, 0
      %s158 = sadd.s32 %s157, 1
      %s159 = scalar_select %p156, %s157, %s158
      %p162 = pneg %p156
      %p163 = scmp.eq.s32.totalorder %s21, 1
      %p164 = por %p162, %p163
      %p165 = scmp.ne.s32.totalorder %s157, %s160
      %p166 = scmp.eq.s32.totalorder %s21, 0
      %p167 = por %p165, %p166
      %p168 = scmp.ne.s32.totalorder %s157, %s160
      %p169 = scmp.eq.s32.totalorder %s26, 1
      %p170 = por %p168, %p169
      %p171 = scmp.ne.s32.totalorder %s160, %s161
      %p172 = scmp.eq.s32.totalorder %s26, 0
      %p173 = por %p171, %p172
      %p174 = scmp.ne.s32.totalorder %s160, %s161
      %p175 = scmp.eq.s32.totalorder %s27, 1
      %p176 = por %p174, %p175
      %p178 = scmp.ne.s32.totalorder %s161, %s177
      %p179 = scmp.eq.s32.totalorder %s27, 0
      %p180 = por %p178, %p179
      %s181 = ssub.s32 %s21, %s28
      %p182 = scmp.eq.s32.totalorder %s181, 0
      %s184 = sadd.s32 %s183, 1
      %s185 = scalar_select %p182, %s183, %s184
      %p188 = pneg %p182
      %p189 = scmp.eq.s32.totalorder %s21, 1
      %p190 = por %p188, %p189
      %p191 = scmp.ne.s32.totalorder %s183, %s186
      %p192 = scmp.eq.s32.totalorder %s21, 0
      %p193 = por %p191, %p192
      %p194 = scmp.ne.s32.totalorder %s183, %s186
      %p195 = scmp.eq.s32.totalorder %s26, 1
      %p196 = por %p194, %p195
      %p197 = scmp.ne.s32.totalorder %s186, %s187
      %p198 = scmp.eq.s32.totalorder %s26, 0
      %p199 = por %p197, %p198
      %p200 = scmp.ne.s32.totalorder %s186, %s187
      %p201 = scmp.eq.s32.totalorder %s27, 1
      %p202 = por %p200, %p201
      %p204 = scmp.ne.s32.totalorder %s187, %s203
      %p205 = scmp.eq.s32.totalorder %s27, 0
      %p206 = por %p204, %p205
      %s207 = ssub.s32 %s21, %s28
      %p208 = scmp.eq.s32.totalorder %s207, 0
      %s210 = sadd.s32 %s209, 1
      %s211 = scalar_select %p208, %s209, %s210
      %p214 = pneg %p208
      %p215 = scmp.eq.s32.totalorder %s21, 1
      %p216 = por %p214, %p215
      %p217 = scmp.ne.s32.totalorder %s209, %s212
      %p218 = scmp.eq.s32.totalorder %s21, 0
      %p219 = por %p217, %p218
      %p220 = scmp.ne.s32.totalorder %s209, %s212
      %p221 = scmp.eq.s32.totalorder %s26, 1
      %p222 = por %p220, %p221
      %p223 = scmp.ne.s32.totalorder %s212, %s213
      %p224 = scmp.eq.s32.totalorder %s26, 0
      %p225 = por %p223, %p224
      %p226 = scmp.ne.s32.totalorder %s212, %s213
      %p227 = scmp.eq.s32.totalorder %s27, 1
      %p228 = por %p226, %p227
      %p230 = scmp.ne.s32.totalorder %s213, %s229
      %p231 = scmp.eq.s32.totalorder %s27, 0
      %p232 = por %p230, %p231
      %s233 = ssub.s32 %s21, %s28
      %p234 = scmp.eq.s32.totalorder %s233, 0
      %s236 = sadd.s32 %s235, 1
      %s237 = scalar_select %p234, %s235, %s236
      %p240 = pneg %p234
      %p241 = scmp.eq.s32.totalorder %s21, 1
      %p242 = por %p240, %p241
      %p243 = scmp.ne.s32.totalorder %s235, %s238
      %p244 = scmp.eq.s32.totalorder %s21, 0
      %p245 = por %p243, %p244
      %p246 = scmp.ne.s32.totalorder %s235, %s238
      %p247 = scmp.eq.s32.totalorder %s26, 1
      %p248 = por %p246, %p247
      %p249 = scmp.ne.s32.totalorder %s238, %s239
      %p250 = scmp.eq.s32.totalorder %s26, 0
      %p251 = por %p249, %p250
      %p252 = scmp.ne.s32.totalorder %s238, %s239
      %p253 = scmp.eq.s32.totalorder %s27, 1
      %p254 = por %p252, %p253
      %p256 = scmp.ne.s32.totalorder %s239, %s255
      %p257 = scmp.eq.s32.totalorder %s27, 0
      %p258 = por %p256, %p257
      %s259 = ssub.s32 %s21, %s28
      %p260 = scmp.eq.s32.totalorder %s259, 0
      %s262 = sadd.s32 %s261, 1
      %s263 = scalar_select %p260, %s261, %s262
      %p266 = pneg %p260
      %p267 = scmp.eq.s32.totalorder %s21, 1
      %p268 = por %p266, %p267
      %p269 = scmp.ne.s32.totalorder %s261, %s264
      %p270 = scmp.eq.s32.totalorder %s21, 0
      %p271 = por %p269, %p270
      %p272 = scmp.ne.s32.totalorder %s261, %s264
      %p273 = scmp.eq.s32.totalorder %s26, 1
      %p274 = por %p272, %p273
      %p275 = scmp.ne.s32.totalorder %s264, %s265
      %p276 = scmp.eq.s32.totalorder %s26, 0
      %p277 = por %p275, %p276
      %p278 = scmp.ne.s32.totalorder %s264, %s265
      %p279 = scmp.eq.s32.totalorder %s27, 1
      %p280 = por %p278, %p279
      %p282 = scmp.ne.s32.totalorder %s265, %s281
      %p283 = scmp.eq.s32.totalorder %s27, 0
      %p284 = por %p282, %p283
      %s285 = ssub.s32 %s21, %s28
      %p286 = scmp.eq.s32.totalorder %s285, 0
      %s288 = sadd.s32 %s287, 1
      %s289 = scalar_select %p286, %s287, %s288
      %p292 = pneg %p286
      %p293 = scmp.eq.s32.totalorder %s21, 1
      %p294 = por %p292, %p293
      %p295 = scmp.ne.s32.totalorder %s287, %s290
      %p296 = scmp.eq.s32.totalorder %s21, 0
      %p297 = por %p295, %p296
      %p298 = scmp.ne.s32.totalorder %s287, %s290
      %p299 = scmp.eq.s32.totalorder %s26, 1
      %p300 = por %p298, %p299
      %p301 = scmp.ne.s32.totalorder %s290, %s291
      %p302 = scmp.eq.s32.totalorder %s26, 0
      %p303 = por %p301, %p302
      %p304 = scmp.ne.s32.totalorder %s290, %s291
      %p305 = scmp.eq.s32.totalorder %s27, 1
      %p306 = por %p304, %p305
      %p308 = scmp.ne.s32.totalorder %s291, %s307
      %p309 = scmp.eq.s32.totalorder %s27, 0
      %p310 = por %p308, %p309
      %s311 = ssub.s32 %s21, %s28
      %p312 = scmp.eq.s32.totalorder %s311, 0
      %s314 = sadd.s32 %s313, 1
      %s315 = scalar_select %p312, %s313, %s314
      %p318 = pneg %p312
      %p319 = scmp.eq.s32.totalorder %s21, 1
      %p320 = por %p318, %p319
      %p321 = scmp.ne.s32.totalorder %s313, %s316
      %p322 = scmp.eq.s32.totalorder %s21, 0
      %p323 = por %p321, %p322
      %p324 = scmp.ne.s32.totalorder %s313, %s316
      %p325 = scmp.eq.s32.totalorder %s26, 1
      %p326 = por %p324, %p325
      %p327 = scmp.ne.s32.totalorder %s316, %s317
      %p328 = scmp.eq.s32.totalorder %s26, 0
      %p329 = por %p327, %p328
      %p330 = scmp.ne.s32.totalorder %s316, %s317
      %p331 = scmp.eq.s32.totalorder %s27, 1
      %p332 = por %p330, %p331
      %p334 = scmp.ne.s32.totalorder %s317, %s333
      %p335 = scmp.eq.s32.totalorder %s27, 0
      %p336 = por %p334, %p335
      %s337 = ssub.s32 %s21, %s28
      %p338 = scmp.eq.s32.totalorder %s337, 0
      %s340 = sadd.s32 %s339, 1
      %s341 = scalar_select %p338, %s339, %s340
      %p344 = pneg %p338
      %p345 = scmp.eq.s32.totalorder %s21, 1
      %p346 = por %p344, %p345
      %p347 = scmp.ne.s32.totalorder %s339, %s342
      %p348 = scmp.eq.s32.totalorder %s21, 0
      %p349 = por %p347, %p348
      %p350 = scmp.ne.s32.totalorder %s339, %s342
      %p351 = scmp.eq.s32.totalorder %s26, 1
      %p352 = por %p350, %p351
      %p353 = scmp.ne.s32.totalorder %s342, %s343
      %p354 = scmp.eq.s32.totalorder %s26, 0
      %p355 = por %p353, %p354
      %p356 = scmp.ne.s32.totalorder %s342, %s343
      %p357 = scmp.eq.s32.totalorder %s27, 1
      %p358 = por %p356, %p357
      %p360 = scmp.ne.s32.totalorder %s343, %s359
      %p361 = scmp.eq.s32.totalorder %s27, 0
      %p362 = por %p360, %p361
      %s364 = sadd.s32 %s363, 1
      %p367 = scmp.eq.s32.totalorder %s21, 1
      %p368 = scmp.ne.s32.totalorder %s363, %s365
      %p369 = scmp.eq.s32.totalorder %s21, 0
      %p370 = por %p368, %p369
      %p371 = scmp.ne.s32.totalorder %s363, %s365
      %p372 = scmp.eq.s32.totalorder %s26, 1
      %p373 = por %p371, %p372
      %p374 = scmp.ne.s32.totalorder %s365, %s366
      %p375 = scmp.eq.s32.totalorder %s26, 0
      %p376 = por %p374, %p375
      %p377 = scmp.ne.s32.totalorder %s365, %s366
      %p378 = scmp.eq.s32.totalorder %s27, 1
      %p379 = por %p377, %p378
      %p381 = scmp.ne.s32.totalorder %s366, %s380
      %p382 = scmp.eq.s32.totalorder %s27, 0
      %p383 = por %p381, %p382
      %p384 = scmp.le.s32.totalorder 1, %s21
      %p385 = scmp.lt.s32.totalorder %s21, 3
      %p386 = pnand %p384, %p385
      %p387 = pneg %p386
      // Predicated region
      $region9: #{tpu_custom_call.1} parent=5 // pred_check
        _
      $region10: #{tpu_custom_call.1} parent=5 // pred_check_branch
        %389 = sbr.rel (%p386) target = $region12
      $region11: #{tpu_custom_call.1} parent=5 // pred_region
        %s390 = ssub.s32 %s21, 1
        // Predicated region
        $region13: #{tpu_custom_call.1} parent=11 // pred_check
          %p391 = pneg %p42
        $region14: #{tpu_custom_call.1} parent=11 // pred_check_branch
          %393 = sbr.rel (%p391) target = $region16
        $region15: #{tpu_custom_call.1} parent=11 // pred_region
          _
        $region16: #{tpu_custom_call.1} parent=11 // pred_fallthru
          _
        // Predicated region
        $region17: #{tpu_custom_call.1} parent=11 // pred_check
          %p394 = pneg %p63
        $region18: #{tpu_custom_call.1} parent=11 // pred_check_branch
          %396 = sbr.rel (%p394) target = $region20
        $region19: #{tpu_custom_call.1} parent=11 // pred_region
          _
        $region20: #{tpu_custom_call.1} parent=11 // pred_fallthru
          _
        // Predicated region
        $region21: #{tpu_custom_call.1} parent=11 // pred_check
          %p397 = pneg %p84
        $region22: #{tpu_custom_call.1} parent=11 // pred_check_branch
          %399 = sbr.rel (%p397) target = $region24
        $region23: #{tpu_custom_call.1} parent=11 // pred_region
          _
        $region24: #{tpu_custom_call.1} parent=11 // pred_fallthru
          _
        // Predicated region
        $region25: #{tpu_custom_call.1} parent=11 // pred_check
          %p400 = pneg %p105
        $region26: #{tpu_custom_call.1} parent=11 // pred_check_branch
          %402 = sbr.rel (%p400) target = $region28
        $region27: #{tpu_custom_call.1} parent=11 // pred_region
          _
        $region28: #{tpu_custom_call.1} parent=11 // pred_fallthru
          _
        // Predicated region
        $region29: #{tpu_custom_call.1} parent=11 // pred_check
          %p403 = pneg %p126
        $region30: #{tpu_custom_call.1} parent=11 // pred_check_branch
          %405 = sbr.rel (%p403) target = $region32
        $region31: #{tpu_custom_call.1} parent=11 // pred_region
          _
        $region32: #{tpu_custom_call.1} parent=11 // pred_fallthru
          _
        // Predicated region
        $region33: #{tpu_custom_call.1} parent=11 // pred_check
          %p406 = pneg %p147
        $region34: #{tpu_custom_call.1} parent=11 // pred_check_branch
          %408 = sbr.rel (%p406) target = $region36
        $region35: #{tpu_custom_call.1} parent=11 // pred_region
          _
        $region36: #{tpu_custom_call.1} parent=11 // pred_fallthru
          _
      $region12: #{tpu_custom_call.1} parent=5 // pred_fallthru
        _
      %p409 = scmp.lt.s32.totalorder %s21, 2
      // Predicated region
      $region37: #{tpu_custom_call.1} parent=5 // pred_check
        %p410 = pneg %p409
      $region38: #{tpu_custom_call.1} parent=5 // pred_check_branch
        %412 = sbr.rel (%p410) target = $region40
      $region39: #{tpu_custom_call.1} parent=5 // pred_region
        // Predicated region
        $region41: #{tpu_custom_call.1} parent=39 // pred_check
          %p413 = pneg %p167
        $region42: #{tpu_custom_call.1} parent=39 // pred_check_branch
          %415 = sbr.rel (%p413) target = $region44
        $region43: #{tpu_custom_call.1} parent=39 // pred_region
          %p416 = scmp.lt.s32.totalorder %s21, 1
          %s417 = scalar_select %p416, %s21, 1
          %s418 = smul.addr %s417, 12
          %s419 = smul.addr %s418, 4
          %s420 = scalar_lea.vmem %s6, %s419
        $region44: #{tpu_custom_call.1} parent=39 // pred_fallthru
          _
        // Predicated region
        $region45: #{tpu_custom_call.1} parent=39 // pred_check
          %p421 = pneg %p193
        $region46: #{tpu_custom_call.1} parent=39 // pred_check_branch
          %423 = sbr.rel (%p421) target = $region48
        $region47: #{tpu_custom_call.1} parent=39 // pred_region
          %p424 = scmp.lt.s32.totalorder %s21, 1
          %s425 = scalar_select %p424, %s21, 1
          %s426 = smul.addr %s425, 12
          %s427 = smul.addr %s426, 4
          %s428 = scalar_lea.vmem %s7, %s427
        $region48: #{tpu_custom_call.1} parent=39 // pred_fallthru
          _
        // Predicated region
        $region49: #{tpu_custom_call.1} parent=39 // pred_check
          %p429 = pneg %p219
        $region50: #{tpu_custom_call.1} parent=39 // pred_check_branch
          %431 = sbr.rel (%p429) target = $region52
        $region51: #{tpu_custom_call.1} parent=39 // pred_region
          %p432 = scmp.lt.s32.totalorder %s21, 1
          %s433 = scalar_select %p432, %s21, 1
          %s434 = scalar_lea.vmem %s8, %s433
        $region52: #{tpu_custom_call.1} parent=39 // pred_fallthru
          _
        // Predicated region
        $region53: #{tpu_custom_call.1} parent=39 // pred_check
          %p435 = pneg %p245
        $region54: #{tpu_custom_call.1} parent=39 // pred_check_branch
          %437 = sbr.rel (%p435) target = $region56
        $region55: #{tpu_custom_call.1} parent=39 // pred_region
          %p438 = scmp.lt.s32.totalorder %s21, 1
          %s439 = scalar_select %p438, %s21, 1
          %s440 = scalar_lea.vmem %s9, %s439
        $region56: #{tpu_custom_call.1} parent=39 // pred_fallthru
          _
        // Predicated region
        $region57: #{tpu_custom_call.1} parent=39 // pred_check
          %p441 = pneg %p271
        $region58: #{tpu_custom_call.1} parent=39 // pred_check_branch
          %443 = sbr.rel (%p441) target = $region60
        $region59: #{tpu_custom_call.1} parent=39 // pred_region
          %p444 = scmp.lt.s32.totalorder %s21, 1
          %s445 = scalar_select %p444, %s21, 1
          %s446 = smul.addr %s445, 4
          %s447 = smul.addr %s446, 4
          %s448 = scalar_lea.vmem %s10, %s447
        $region60: #{tpu_custom_call.1} parent=39 // pred_fallthru
          _
        // Predicated region
        $region61: #{tpu_custom_call.1} parent=39 // pred_check
          %p449 = pneg %p297
        $region62: #{tpu_custom_call.1} parent=39 // pred_check_branch
          %451 = sbr.rel (%p449) target = $region64
        $region63: #{tpu_custom_call.1} parent=39 // pred_region
          %p452 = scmp.lt.s32.totalorder %s21, 1
          %s453 = scalar_select %p452, %s21, 1
          %s454 = scalar_lea.vmem %s11, %s453
        $region64: #{tpu_custom_call.1} parent=39 // pred_fallthru
          _
        // Predicated region
        $region65: #{tpu_custom_call.1} parent=39 // pred_check
          %p455 = pneg %p323
        $region66: #{tpu_custom_call.1} parent=39 // pred_check_branch
          %457 = sbr.rel (%p455) target = $region68
        $region67: #{tpu_custom_call.1} parent=39 // pred_region
          %p458 = scmp.lt.s32.totalorder %s21, 1
          %s459 = scalar_select %p458, %s21, 1
          %s460 = smul.addr %s459, 4
          %s461 = smul.addr %s460, 4
          %s462 = scalar_lea.vmem %s12, %s461
        $region68: #{tpu_custom_call.1} parent=39 // pred_fallthru
          _
        // Predicated region
        $region69: #{tpu_custom_call.1} parent=39 // pred_check
          %p463 = pneg %p349
        $region70: #{tpu_custom_call.1} parent=39 // pred_check_branch
          %465 = sbr.rel (%p463) target = $region72
        $region71: #{tpu_custom_call.1} parent=39 // pred_region
          %p466 = scmp.lt.s32.totalorder %s21, 1
          %s467 = scalar_select %p466, %s21, 1
          %s468 = scalar_lea.vmem %s13, %s467
        $region72: #{tpu_custom_call.1} parent=39 // pred_fallthru
          _
      $region40: #{tpu_custom_call.1} parent=5 // pred_fallthru
        _
      %p469 = scmp.le.s32.totalorder 1, %s21
      %p470 = scmp.lt.s32.totalorder %s21, 3
      %p471 = pnand %p469, %p470
      %p472 = pneg %p471
      // Predicated region
      $region73: #{tpu_custom_call.1} parent=5 // pred_check
        _
      $region74: #{tpu_custom_call.1} parent=5 // pred_check_branch
        %474 = sbr.rel (%p471) target = $region76
      $region75: #{tpu_custom_call.1} parent=5 // pred_region
        %s475 = ssub.s32 %s21, 1
        %p476 = pneg %p42
        %p477 = pneg %p39
        %p478 = pneg %p63
        %p479 = pneg %p60
        %p480 = pneg %p84
        %p481 = pneg %p81
        %p482 = pneg %p105
        %p483 = pneg %p102
        %p484 = pneg %p126
        %p485 = pneg %p123
        %p486 = pneg %p147
        %p487 = pneg %p144
        %p488 = scmp.lt.s32.totalorder %s26, 1
        %s489 = scalar_select %p488, %s26, 1
        %s490 = smul.addr %s489, 12
        %s491 = smul.addr %s490, 4
        %s492 = scalar_lea.vmem %s6, %s491
        %p493 = pneg %p173
        %p494 = pneg %p170
        %p495 = scmp.lt.s32.totalorder %s26, 1
        %s496 = scalar_select %p495, %s26, 1
        %s497 = smul.addr %s496, 12
        %s498 = smul.addr %s497, 4
        %s499 = scalar_lea.vmem %s7, %s498
        %p500 = pneg %p199
        %p501 = pneg %p196
        %p502 = scmp.lt.s32.totalorder %s26, 1
        %s503 = scalar_select %p502, %s26, 1
        %s504 = scalar_lea.vmem %s8, %s503
        %p505 = pneg %p225
        %p506 = pneg %p222
        %p507 = scmp.lt.s32.totalorder %s26, 1
        %s508 = scalar_select %p507, %s26, 1
        %s509 = scalar_lea.vmem %s9, %s508
        %p510 = pneg %p251
        %p511 = pneg %p248
        %p512 = scmp.lt.s32.totalorder %s26, 1
        %s513 = scalar_select %p512, %s26, 1
        %s514 = smul.addr %s513, 4
        %s515 = smul.addr %s514, 4
        %s516 = scalar_lea.vmem %s10, %s515
        %p517 = pneg %p277
        %p518 = pneg %p274
        %p519 = scmp.lt.s32.totalorder %s26, 1
        %s520 = scalar_select %p519, %s26, 1
        %s521 = scalar_lea.vmem %s11, %s520
        %p522 = pneg %p303
        %p523 = pneg %p300
        %p524 = scmp.lt.s32.totalorder %s26, 1
        %s525 = scalar_select %p524, %s26, 1
        %s526 = smul.addr %s525, 4
        %s527 = smul.addr %s526, 4
        %s528 = scalar_lea.vmem %s12, %s527
        %p529 = pneg %p329
        %p530 = pneg %p326
        %p531 = scmp.lt.s32.totalorder %s26, 1
        %s532 = scalar_select %p531, %s26, 1
        %s533 = scalar_lea.vmem %s13, %s532
        %p534 = pneg %p355
        %p535 = pneg %p352
        %p536 = pneg %p376
        %p537 = pneg %p373
        %p538 = scmp.lt.s32.totalorder %s26, 1
        %s539 = scalar_select %p538, %s26, 1
        %s540 = smul.addr %s539, 12
        %s541 = smul.addr %s540, 4
        %s542 = scalar_lea.vmem %s6, %s541
        %p543 = scmp.lt.s32.totalorder %s26, 1
        %s544 = scalar_select %p543, %s26, 1
        %s545 = smul.addr %s544, 12
        %s546 = smul.addr %s545, 4
        %s547 = scalar_lea.vmem %s7, %s546
        %p548 = scmp.lt.s32.totalorder %s26, 1
        %s549 = scalar_select %p548, %s26, 1
        %s550 = scalar_lea.vmem %s8, %s549
        %p551 = scmp.lt.s32.totalorder %s26, 1
        %s552 = scalar_select %p551, %s26, 1
        %s553 = scalar_lea.vmem %s9, %s552
        %p554 = scmp.lt.s32.totalorder %s26, 1
        %s555 = scalar_select %p554, %s26, 1
        %s556 = smul.addr %s555, 4
        %s557 = smul.addr %s556, 4
        %s558 = scalar_lea.vmem %s10, %s557
        %p559 = scmp.lt.s32.totalorder %s26, 1
        %s560 = scalar_select %p559, %s26, 1
        %s561 = scalar_lea.vmem %s11, %s560
        %p562 = scmp.lt.s32.totalorder %s26, 1
        %s563 = scalar_select %p562, %s26, 1
        %s564 = smul.addr %s563, 4
        %s565 = smul.addr %s564, 4
        %s566 = scalar_lea.vmem %s12, %s565
        %p567 = scmp.lt.s32.totalorder %s26, 1
        %s568 = scalar_select %p567, %s26, 1
        %s569 = scalar_lea.vmem %s13, %s568
        %p571 = scmp.eq.s32.totalorder %s26, 0
        // Predicated region
        $region77: #{tpu_custom_call.1} parent=75 // pred_check
          %p572 = pneg %p571
        $region78: #{tpu_custom_call.1} parent=75 // pred_check_branch
          %574 = sbr.rel (%p572) target = $region80
        $region79: #{tpu_custom_call.1} parent=75 // pred_region
          %v575 = vld [vmem:[%s0] sm:$0xff]
          %v576 = vld [vmem:[%s0 + $0x8] sm:$0xff]
          %v577 = vpack.c.bf16 %v576, %v575
          %v578 = vld [vmem:[%s4] sm:$0xf]
          %v579 = vld [vmem:[%s4 + $0x4] sm:$0xf]
          %v580 = vld [vmem:[%s4 + $0x8] sm:$0xf]
          %v581 = vld [vmem:[%s4 + $0xc] sm:$0xf]
          %v582 = vld [vmem:[%s5] sm:$0x1]
          %v584 = vperm.slane %v582, 0
          %v590 = vunpack.c.l.b16 %v578
          %v591 = vunpack.c.l.b16 %v579
          %v592 = vunpack.c.l.b16 %v580
          %v593 = vunpack.c.l.b16 %v581
          %v594 = vpack.c.b16 %v591, %v590
          %v595 = vpack.c.b16 %v593, %v592
          %vm598 = vcmask 261120
          %v600 = vsel %vm598, %v577, 0
          %602 = vmatpush.bf16.msra.mxu0 0
          %603 = vmatpush.bf16.msra.mxu0 0
          %604 = vmatpush.bf16.msra.mxu0 0
          %605 = vmatpush.bf16.msra.mxu0 0
          %606 = vmatpush.bf16.msra.mxu0 0
          %607 = vmatpush.bf16.msra.mxu0 0
          %608 = vmatpush.bf16.msra.mxu0 %v595
          %609 = vmatpush.bf16.msra.mxu0 %v594
          %610 = vmatmul.bf16.gmra.mxu0 %v600
          %v611 = vpop.f32.mrf.mxu0
          %v612 = vadd.f32 %v584, %v611
          %v613 = vpop.f32.mrf.mxu0
          %v614 = vadd.f32 %v584, %v613
          %615 = vdwg.mxu0
          %616 = vst.msk [vmem:[#allocation2] sm:$0xff] %vm598, %v612
          %617 = vst.msk [vmem:[#allocation2 + $0x8] sm:$0xff] %vm598, %v614
        $region80: #{tpu_custom_call.1} parent=75 // pred_fallthru
          _
        %v618 = vld [vmem:[#allocation2] sm:$0xff]
        %v619 = vld [vmem:[#allocation2 + $0x8] sm:$0xff]
        %v620 = vld [vmem:[%s0] sm:$0xff]
        %v621 = vld [vmem:[%s0 + $0x8] sm:$0xff]
        %v622 = vld [vmem:[%s1] sm:$0xf]
        %v623 = vld [vmem:[%s1 + $0x4] sm:$0x1]
        %v624 = vld [vmem:[%s1 + $0x8] sm:$0xf]
        %v625 = vld [vmem:[%s1 + $0xc] sm:$0x1]
        %v626 = vld [vmem:[%s2] sm:$0xf]
        %v627 = vld [vmem:[%s2 + $0x4] sm:$0x1]
        %v628 = vld [vmem:[%s2 + $0x8] sm:$0xf]
        %v629 = vld [vmem:[%s2 + $0xc] sm:$0x1]
        %v630 = vld [vmem:[%s3] sm:$0x1]
        %v631 = vld [vmem:[%s3 + $0x1] sm:$0x1]
        %v632 = vld [vmem:[%s542] sm:$0xf]
        %v633 = vld [vmem:[%s542 + $0x4] sm:$0xf]
        %v634 = vld [vmem:[%s542 + $0x8] sm:$0xf]
        %v635 = vld [vmem:[%s542 + $0xc] sm:$0xf]
        %v636 = vld [vmem:[%s542 + $0x10] sm:$0xf]
        %v637 = vld [vmem:[%s542 + $0x14] sm:$0xf]
        %v638 = vld [vmem:[%s542 + $0x18] sm:$0xf]
        %v639 = vld [vmem:[%s542 + $0x1c] sm:$0xf]
        %v640 = vld [vmem:[%s542 + $0x20] sm:$0xf]
        %v641 = vld [vmem:[%s542 + $0x24] sm:$0xf]
        %v642 = vld [vmem:[%s542 + $0x28] sm:$0xf]
        %v643 = vld [vmem:[%s542 + $0x2c] sm:$0xf]
        %v644 = vld [vmem:[%s547] sm:$0xf]
        %v645 = vld [vmem:[%s547 + $0x4] sm:$0xf]
        %v646 = vld [vmem:[%s547 + $0x8] sm:$0xf]
        %v647 = vld [vmem:[%s547 + $0xc] sm:$0xf]
        %v648 = vld [vmem:[%s547 + $0x10] sm:$0xf]
        %v649 = vld [vmem:[%s547 + $0x14] sm:$0xf]
        %v650 = vld [vmem:[%s547 + $0x18] sm:$0xf]
        %v651 = vld [vmem:[%s547 + $0x1c] sm:$0xf]
        %v652 = vld [vmem:[%s547 + $0x20] sm:$0xf]
        %v653 = vld [vmem:[%s547 + $0x24] sm:$0xf]
        %v654 = vld [vmem:[%s547 + $0x28] sm:$0xf]
        %v655 = vld [vmem:[%s547 + $0x2c] sm:$0xf]
        %v656 = vld [vmem:[%s550] sm:$0x1]
        %v657 = vld [vmem:[%s553] sm:$0x1]
        %v658 = vld [vmem:[%s558] sm:$0xf]
        %v659 = vld [vmem:[%s558 + $0x4] sm:$0xf]
        %v660 = vld [vmem:[%s558 + $0x8] sm:$0xf]
        %v661 = vld [vmem:[%s558 + $0xc] sm:$0xf]
        %v662 = vld [vmem:[%s561] sm:$0x1]
        %v663 = vld [vmem:[%s566] sm:$0xf]
        %v664 = vld [vmem:[%s566 + $0x4] sm:$0xf]
        %v665 = vld [vmem:[%s566 + $0x8] sm:$0xf]
        %v666 = vld [vmem:[%s566 + $0xc] sm:$0xf]
        %v667 = vld [vmem:[%s569] sm:$0x1]
        %v670 = vrot.slane %v618, 6
        %v671 = vrot.slane %v619, 6
        %vm674 = vcmask 1041408
        %v675 = vsel %vm674, 1.0, %v670
        %v676 = vsel %vm674, 1.0, %v671
        %vm679 = vcmask 1046528
        %v680 = vrot.slane %v675, 1
        %v681 = vrot.slane %v670, 1
        %v682 = vsel %vm679, %v680, %v681
        %v683 = vrot.slane %v676, 1
        %v684 = vrot.slane %v671, 1
        %v685 = vsel %vm679, %v683, %v684
        %686 = vrot.lane.b32.xlu0 %v682, 32
        %v687 = vpop.permute.xlu0 %686
        %688 = vrot.lane.b32.xlu0 %v685, 32
        %v689 = vpop.permute.xlu0 %688
        %vm692 = vcmask 1045504
        %v693 = vrot.slane %v675, 2
        %v694 = vrot.slane %v670, 2
        %v695 = vsel %vm692, %v693, %v694
        %v696 = vrot.slane %v676, 2
        %v697 = vrot.slane %v671, 2
        %v698 = vsel %vm692, %v696, %v697
        %699 = vrot.lane.b32.xlu0 %v695, 64
        %v700 = vpop.permute.xlu0 %699
        %701 = vrot.lane.b32.xlu0 %v698, 64
        %v702 = vpop.permute.xlu0 %701
        %vm705 = vcmask 261120
        %v706 = vsel %vm705, %v675, %v687
        %v707 = vsel %vm705, %v676, %v689
        %vm708 = vcmask 523264
        %v709 = vsel %vm708, %v706, %v700
        %v710 = vsel %vm708, %v707, %v702
        %v711 = vpack.c.bf16 %v710, %v709
        %v713 = vperm.slane %v656, 0
        %v727 = vunpack.c.l.b16 %v632
        %v728 = vunpack.c.l.b16 %v633
        %v729 = vunpack.c.l.b16 %v634
        %v730 = vunpack.c.l.b16 %v635
        %v731 = vunpack.c.l.b16 %v636
        %v732 = vunpack.c.l.b16 %v637
        %v733 = vunpack.c.l.b16 %v638
        %v734 = vunpack.c.l.b16 %v639
        %v735 = vunpack.c.l.b16 %v640
        %v736 = vunpack.c.l.b16 %v641
        %v737 = vunpack.c.l.b16 %v642
        %v738 = vunpack.c.l.b16 %v643
        %v739 = vpack.c.b16 %v728, %v727
        %v740 = vpack.c.b16 %v730, %v729
        %v741 = vpack.c.b16 %v732, %v731
        %v742 = vpack.c.b16 %v734, %v733
        %v743 = vpack.c.b16 %v736, %v735
        %v744 = vpack.c.b16 %v738, %v737
        %vm751 = vcmask 785408
        %v753 = vsel %vm751, %v711, 0
        %755 = vmatpush.bf16.msra.mxu0 0
        %756 = vmatpush.bf16.msra.mxu0 0
        %757 = vmatpush.bf16.msra.mxu0 %v744
        %758 = vmatpush.bf16.msra.mxu0 %v743
        %759 = vmatpush.bf16.msra.mxu0 %v742
        %760 = vmatpush.bf16.msra.mxu0 %v741
        %761 = vmatpush.bf16.msra.mxu0 %v740
        %762 = vmatpush.bf16.msra.mxu0 %v739
        %763 = vmatmul.bf16.gmra.mxu0 %v753
        %v764 = vpop.f32.mrf.mxu0
        %v765 = vadd.f32 %v713, %v764
        %v766 = vpop.f32.mrf.mxu0
        %v767 = vadd.f32 %v713, %v766
        %768 = vdwg.mxu0
        %v770 = vperm.slane %v657, 0
        %v784 = vunpack.c.l.b16 %v644
        %v785 = vunpack.c.l.b16 %v645
        %v786 = vunpack.c.l.b16 %v646
        %v787 = vunpack.c.l.b16 %v647
        %v788 = vunpack.c.l.b16 %v648
        %v789 = vunpack.c.l.b16 %v649
        %v790 = vunpack.c.l.b16 %v650
        %v791 = vunpack.c.l.b16 %v651
        %v792 = vunpack.c.l.b16 %v652
        %v793 = vunpack.c.l.b16 %v653
        %v794 = vunpack.c.l.b16 %v654
        %v795 = vunpack.c.l.b16 %v655
        %v796 = vpack.c.b16 %v785, %v784
        %v797 = vpack.c.b16 %v787, %v786
        %v798 = vpack.c.b16 %v789, %v788
        %v799 = vpack.c.b16 %v791, %v790
        %v800 = vpack.c.b16 %v793, %v792
        %v801 = vpack.c.b16 %v795, %v794
        %808 = vmatpush.bf16.msra.mxu0 0
        %809 = vmatpush.bf16.msra.mxu0 0
        %810 = vmatpush.bf16.msra.mxu0 %v801
        %811 = vmatpush.bf16.msra.mxu0 %v800
        %812 = vmatpush.bf16.msra.mxu0 %v799
        %813 = vmatpush.bf16.msra.mxu0 %v798
        %814 = vmatpush.bf16.msra.mxu0 %v797
        %815 = vmatpush.bf16.msra.mxu0 %v796
        %816 = vmatmul.bf16.gmra.mxu0 %v753
        %v817 = vpop.f32.mrf.mxu0
        %v818 = vadd.f32 %v770, %v817
        %v819 = vpop.f32.mrf.mxu0
        %v820 = vadd.f32 %v770, %v819
        %821 = vdwg.mxu0
        %v822 = vxor.u32 %v818, 2147483648
        %v823 = vxor.u32 %v820, 2147483648
        %v824 = vmul.f32 %v822, 1.442695
        %v825 = vpow.pop %v824
        %v826 = vmul.f32 %v823, 1.442695
        %v827 = vpow.pop %v826
        %v828 = vadd.f32 %v825, 1.0
        %v829 = vadd.f32 %v827, 1.0
        %v830 = vrcp.pop %v828
        %v831 = vmul.f32 %v828, %v830
        %v832 = vsub.f32 1.0, %v831
        %v833 = vmul.f32 %v830, %v832
        %v834 = vadd.f32 %v830, %v833
        %vm835 = vweird.f32 %v828
        %vm836 = vweird.f32 %v830
        %vm837 = vmor %vm835, %vm836
        %v838 = vsel %vm837, %v830, %v834
        %v839 = vand.u32 2147483647, %v828
        %vm840 = vcmp.eq.f32.partialorder %v839, 8.507059e+37
        %v841 = vand.u32 %v828, 2147483648
        %v842 = vor.u32 1.1754944e-38, %v841
        %v843 = vsel %vm840, %v842, %v838
        %v844 = vmul.f32 1.0, %v843
        %v845 = vrcp.pop %v829
        %v846 = vmul.f32 %v829, %v845
        %v847 = vsub.f32 1.0, %v846
        %v848 = vmul.f32 %v845, %v847
        %v849 = vadd.f32 %v845, %v848
        %vm850 = vweird.f32 %v829
        %vm851 = vweird.f32 %v845
        %vm852 = vmor %vm850, %vm851
        %v853 = vsel %vm852, %v845, %v849
        %v854 = vand.u32 2147483647, %v829
        %vm855 = vcmp.eq.f32.partialorder %v854, 8.507059e+37
        %v856 = vand.u32 %v829, 2147483648
        %v857 = vor.u32 1.1754944e-38, %v856
        %v858 = vsel %vm855, %v857, %v853
        %v859 = vmul.f32 1.0, %v858
        %v860 = vmul.f32 %v765, %v844
        %v861 = vmul.f32 %v767, %v859
        %v862 = vpack.c.bf16 %v861, %v860
        %v864 = vperm.slane %v662, 0
        %v870 = vunpack.c.l.b16 %v658
        %v871 = vunpack.c.l.b16 %v659
        %v872 = vunpack.c.l.b16 %v660
        %v873 = vunpack.c.l.b16 %v661
        %v874 = vpack.c.b16 %v871, %v870
        %v875 = vpack.c.b16 %v873, %v872
        %v879 = vsel %vm705, %v862, 0
        %881 = vmatpush.bf16.msra.mxu0 0
        %882 = vmatpush.bf16.msra.mxu0 0
        %883 = vmatpush.bf16.msra.mxu0 0
        %884 = vmatpush.bf16.msra.mxu0 0
        %885 = vmatpush.bf16.msra.mxu0 0
        %886 = vmatpush.bf16.msra.mxu0 0
        %887 = vmatpush.bf16.msra.mxu0 %v875
        %888 = vmatpush.bf16.msra.mxu0 %v874
        %889 = vmatmul.bf16.gmra.mxu0 %v879
        %v890 = vpop.f32.mrf.mxu0
        %v891 = vadd.f32 %v864, %v890
        %v892 = vpop.f32.mrf.mxu0
        %v893 = vadd.f32 %v864, %v892
        %894 = vdwg.mxu0
        %v895 = vadd.f32 %v891, %v620
        %v896 = vadd.f32 %v893, %v621
        %v897 = vmul.f32 %v895, 0.70710677
        %v898 = vmul.f32 %v896, 0.70710677
        %v899 = vpack.c.bf16 %v897, %v897
        %v900 = vpack.c.bf16 %v898, %v898
        %v903 = vperm.slane %v630, 0
        %v904 = vperm.slane %v631, 0
        %v909 = vunpack.c.l.b16 %v622
        %v910 = vunpack.c.l.b16 %v623
        %v911 = vpack.c.b16 %v910, %v909
        %v913 = vsel %vm705, %v899, 0
        %v916 = vsel %vm705, %v911, 0
        %918 = vmatpush.bf16.xpose.msra.mxu0 0
        %919 = vmatpush.bf16.xpose.msra.mxu0 0
        %920 = vmatpush.bf16.xpose.msra.mxu0 0
        %921 = vmatpush.bf16.xpose.msra.mxu0 0
        %922 = vmatpush.bf16.xpose.msra.mxu0 0
        %923 = vmatpush.bf16.xpose.msra.mxu0 0
        %924 = vmatpush.bf16.xpose.msra.mxu0 0
        %925 = vmatpush.bf16.xpose.msra.mxu0 %v916
        %926 = vmatmul.bf16.gmra.mxu0 %v913
        %v927 = vpop.f32.mrf.mxu0
        %v928 = vadd.f32 %v903, %v927
        %v929 = vpop.f32.mrf.mxu0
        %930 = vdwg.mxu0
        %v933 = vunpack.c.l.b16 %v624
        %v934 = vunpack.c.l.b16 %v625
        %v935 = vpack.c.b16 %v934, %v933
        %v937 = vsel %vm705, %v900, 0
        %v940 = vsel %vm705, %v935, 0
        %942 = vmatpush.bf16.xpose.msra.mxu0 0
        %943 = vmatpush.bf16.xpose.msra.mxu0 0
        %944 = vmatpush.bf16.xpose.msra.mxu0 0
        %945 = vmatpush.bf16.xpose.msra.mxu0 0
        %946 = vmatpush.bf16.xpose.msra.mxu0 0
        %947 = vmatpush.bf16.xpose.msra.mxu0 0
        %948 = vmatpush.bf16.xpose.msra.mxu0 0
        %949 = vmatpush.bf16.xpose.msra.mxu0 %v940
        %950 = vmatmul.bf16.gmra.mxu0 %v937
        %v951 = vpop.f32.mrf.mxu0
        %v952 = vadd.f32 %v904, %v951
        %v953 = vpop.f32.mrf.mxu0
        %954 = vdwg.mxu0
        %vm955 = vcmask 80896
        %v956 = vsel %vm955, %v928, -inf
        %957 = vmax.xlane.f32.xlu0 %v956
        %v958 = vpop.xlane.xlu0 %957
        %v959 = vsel %vm955, %v952, -inf
        %960 = vmax.xlane.f32.xlu0 %v959
        %v961 = vpop.xlane.xlu0 %960
        %v962 = vsub.f32 %v928, %v958
        %v963 = vsub.f32 %v952, %v961
        %v964 = vmul.f32 %v962, 1.442695
        %v965 = vpow.pop %v964
        %v966 = vmul.f32 %v963, 1.442695
        %v967 = vpow.pop %v966
        %v968 = vsel %vm955, %v965, 0.0
        %969 = vadd.xlane.f32.xlu0 %v968
        %v970 = vpop.xlane.xlu0 %969
        %v971 = vsel %vm955, %v967, 0.0
        %972 = vadd.xlane.f32.xlu0 %v971
        %v973 = vpop.xlane.xlu0 %972
        %v974 = vrcp.pop %v970
        %v975 = vrcp.pop %v973
        %v976 = vmul.f32 %v965, %v974
        %v977 = vmul.f32 %v967, %v975
        %v978 = vpack.c.bf16 %v976, %v976
        %v979 = vpack.c.bf16 %v977, %v977
        %v982 = vunpack.c.l.b16 %v626
        %v983 = vunpack.c.l.b16 %v627
        %v984 = vpack.c.b16 %v983, %v982
        %v986 = vsel %vm955, %v978, 0
        %vm988 = vcmask 1044480
        %v990 = vsel %vm988, %v984, 0
        %992 = vmatpush.bf16.msra.mxu0 0
        %993 = vmatpush.bf16.msra.mxu0 0
        %994 = vmatpush.bf16.msra.mxu0 0
        %995 = vmatpush.bf16.msra.mxu0 0
        %996 = vmatpush.bf16.msra.mxu0 0
        %997 = vmatpush.bf16.msra.mxu0 0
        %998 = vmatpush.bf16.msra.mxu0 0
        %999 = vmatpush.bf16.msra.mxu0 %v990
        %1000 = vmatmul.bf16.gmra.mxu0 %v986
        %v1001 = vpop.f32.mrf.mxu0
        %v1002 = vadd.f32 0.0, %v1001
        %v1003 = vpop.f32.mrf.mxu0
        %1004 = vdwg.mxu0
        %v1007 = vunpack.c.l.b16 %v628
        %v1008 = vunpack.c.l.b16 %v629
        %v1009 = vpack.c.b16 %v1008, %v1007
        %v1011 = vsel %vm955, %v979, 0
        %v1014 = vsel %vm988, %v1009, 0
        %1016 = vmatpush.bf16.msra.mxu0 0
        %1017 = vmatpush.bf16.msra.mxu0 0
        %1018 = vmatpush.bf16.msra.mxu0 0
        %1019 = vmatpush.bf16.msra.mxu0 0
        %1020 = vmatpush.bf16.msra.mxu0 0
        %1021 = vmatpush.bf16.msra.mxu0 0
        %1022 = vmatpush.bf16.msra.mxu0 0
        %1023 = vmatpush.bf16.msra.mxu0 %v1014
        %1024 = vmatmul.bf16.gmra.mxu0 %v1011
        %v1025 = vpop.f32.mrf.mxu0
        %v1026 = vadd.f32 0.0, %v1025
        %v1027 = vpop.f32.mrf.mxu0
        %1028 = vdwg.mxu0
        %v1029 = vpack.c.bf16 %v1026, %v1002
        %v1031 = vperm.slane %v667, 0
        %v1037 = vunpack.c.l.b16 %v663
        %v1038 = vunpack.c.l.b16 %v664
        %v1039 = vunpack.c.l.b16 %v665
        %v1040 = vunpack.c.l.b16 %v666
        %v1041 = vpack.c.b16 %v1038, %v1037
        %v1042 = vpack.c.b16 %v1040, %v1039
        %v1046 = vsel %vm705, %v1029, 0
        %1048 = vmatpush.bf16.msra.mxu0 0
        %1049 = vmatpush.bf16.msra.mxu0 0
        %1050 = vmatpush.bf16.msra.mxu0 0
        %1051 = vmatpush.bf16.msra.mxu0 0
        %1052 = vmatpush.bf16.msra.mxu0 0
        %1053 = vmatpush.bf16.msra.mxu0 0
        %1054 = vmatpush.bf16.msra.mxu0 %v1042
        %1055 = vmatpush.bf16.msra.mxu0 %v1041
        %1056 = vmatmul.bf16.gmra.mxu0 %v1046
        %v1057 = vpop.f32.mrf.mxu0
        %v1058 = vadd.f32 %v1031, %v1057
        %v1059 = vpop.f32.mrf.mxu0
        %v1060 = vadd.f32 %v1031, %v1059
        %1061 = vdwg.mxu0
        %v1062 = vadd.f32 %v860, %v1058
        %v1063 = vadd.f32 %v861, %v1060
        %v1064 = vmul.f32 %v1062, 0.70710677
        %v1065 = vmul.f32 %v1063, 0.70710677
        %v1066 = vadd.f32 %v1064, %v618
        %v1067 = vadd.f32 %v1065, %v619
        %v1068 = vmul.f32 %v1066, 0.70710677
        %v1069 = vmul.f32 %v1067, 0.70710677
        %1070 = vst.msk [vmem:[#allocation2] sm:$0xff] %vm705, %v1068
        %1071 = vst.msk [vmem:[#allocation2 + $0x8] sm:$0xff] %vm705, %v1069
        %p1072 = scmp.eq.s32.totalorder %s26, 1
        // Predicated region
        $region81: #{tpu_custom_call.1} parent=75 // pred_check
          %p1073 = pneg %p1072
        $region82: #{tpu_custom_call.1} parent=75 // pred_check_branch
          %1075 = sbr.rel (%p1073) target = $region84
        $region83: #{tpu_custom_call.1} parent=75 // pred_region
          %1076 = vst.msk [vmem:[#allocation3] sm:$0xff] %vm705, %v1068
          %1077 = vst.msk [vmem:[#allocation3 + $0x8] sm:$0xff] %vm705, %v1069
        $region84: #{tpu_custom_call.1} parent=75 // pred_fallthru
          _
        // Predicated region
        $region85: #{tpu_custom_call.1} parent=75 // pred_check
          %p1078 = pneg %p373
        $region86: #{tpu_custom_call.1} parent=75 // pred_check_branch
          %1080 = sbr.rel (%p1078) target = $region88
        $region87: #{tpu_custom_call.1} parent=75 // pred_region
          %1082 = vsyncadd [#allocation4], 0
          %s1083 = sshll.u32 [#allocation3], 4
          %s1084 = int_to_ptr.vmem [resolvable:$true] %s1083
          %s1085 = sshll.u32 %s14, 4
          %s1086 = int_to_ptr.hbm [resolvable:$true] %s1085
          %1091 = dma.vmem_to_hbm [thread:$0]  %s1084, 256, %s1086, [#allocation4], 128, 128, 8
        $region88: #{tpu_custom_call.1} parent=75 // pred_fallthru
          _
        // Predicated region
        $region89: #{tpu_custom_call.1} parent=75 // pred_check
          %p1092 = pneg %p373
        $region90: #{tpu_custom_call.1} parent=75 // pred_check_branch
          %1094 = sbr.rel (%p1092) target = $region92
        $region91: #{tpu_custom_call.1} parent=75 // pred_region
          %1096 = dma.done [#allocation4], 256
        $region92: #{tpu_custom_call.1} parent=75 // pred_fallthru
          _
      $region76: #{tpu_custom_call.1} parent=5 // pred_fallthru
        _
      %p1097 = scmp.le.s32.totalorder 2, %s21
      // Predicated region
      $region93: #{tpu_custom_call.1} parent=5 // pred_check
        %p1098 = pneg %p1097
      $region94: #{tpu_custom_call.1} parent=5 // pred_check_branch
        %1100 = sbr.rel (%p1098) target = $region96
      $region95: #{tpu_custom_call.1} parent=5 // pred_region
        %s1101 = ssub.s32 %s21, 2
      $region96: #{tpu_custom_call.1} parent=5 // pred_fallthru
        _
    $region6: #{tpu_custom_call.1} parent=1 // loop_footer
      %s25 = sadd.s32 1, %s21
    $region7: #{tpu_custom_call.1} parent=1 // loop_footer_branch
      %20 = sbr.rel target = $region3
    $region8: #{tpu_custom_call.1} parent=1 // loop_exit
      _
    %1102 = vsyncpa [#allocation4], 1
    %s1103 = scalar_lea.sflag [#allocation4], 1
    %1104 = vsyncpa %s1103, 1

</llo_original>
